<compile_context>
chip_gen: v7x
topology: tpu7x:2x2x1
jax: 0.10.0
libtpu: 0.0.40
codegen_flags: <defaults>
</compile_context>

<pallas_src>
import jax
import jax.numpy as jnp
from jax.experimental import pallas as pl
from jax.experimental.pallas import tpu as pltpu

IN_FEATS = 2          # forward input last dim (w0 = nn.Linear(2, hidden))
HIDDEN = 20           # hidden_size (module default)
OUT_CH = 6            # out_channels (>=3 so both exp() and *0.1 branches exist)
N_LAYERS = 10         # w0..w8 (sigmoid-activated) + `last` (no activation)


def _round_up(x, m):
    return ((x + m - 1) // m) * m


def _mlp_kernel(x_ref, w_ref, b_ref, o_ref):
    """x_ref: (IN_FEATS, tile_m)        batch on lanes, features on sublanes
       w_ref: (N_LAYERS, HIDDEN, HIDDEN) torch-layout (out, in), zero-padded
       b_ref: (N_LAYERS, HIDDEN, 1)
       o_ref: (OUT_CH, tile_m)           lane-dense output block
    """
    x = x_ref[...]                                      # (2, tile_m)

    # Layer 0: (20, 2) @ (2, tile_m)  (static slice of the padded weight slot).
    z = (jnp.dot(w_ref[0][:, :IN_FEATS], x, preferred_element_type=jnp.float32)
         + b_ref[0])
    h = jax.nn.sigmoid(z)

    # Layers 1..8: uniform (20,20) @ (20,tile_m) MXU matmuls, lane-dense.
    for i in range(1, N_LAYERS - 1):
        z = jnp.dot(w_ref[i], h, preferred_element_type=jnp.float32) + b_ref[i]
        h = jax.nn.sigmoid(z)

    # Final Linear (padded to (HIDDEN, HIDDEN); extra output rows are zero).
    z = (jnp.dot(w_ref[N_LAYERS - 1], h, preferred_element_type=jnp.float32)
         + b_ref[N_LAYERS - 1])
    out = z[:OUT_CH, :]                                 # (6, tile_m)

    # torch.cat((exp(out[:3]), out[3:] * 0.1)) -> in-register row select.
    row = jax.lax.broadcasted_iota(jnp.int32, out.shape, dimension=0)
    o_ref[...] = jnp.where(row < 3, jnp.exp(out), out * 0.1)


def structure_function_net(x, w_stack, b_stack, *, tile_m=None):
    """x: (N, 2) float. w_stack: (10, 20, 20). b_stack: (10, 20, 1)."""
    n, in_f = x.shape
    assert in_f == IN_FEATS

    if tile_m is None:
        # Big tiles amortise the ~0.35 us per-grid-step overhead; per-tile
        # compute (10 tiny matmuls + 9 sigmoids) and VMEM (<1 MiB) stay small.
        # For N > 2048 this yields >= 2 grid steps so v7x's two TensorCores
        # both get work via the "parallel" grid axis.
        tile_m = min(2048, _round_up(n, 128))
    assert tile_m % 128 == 0

    n_pad = _round_up(n, tile_m)
    grid = (n_pad // tile_m,)

    # Wrapper-side layout plumbing only: batch -> lane axis, zero-pad lanes.
    xt = jnp.pad(x.T.astype(jnp.float32), ((0, 0), (0, n_pad - n)))

    out_t = pl.pallas_call(
        _mlp_kernel,
        out_shape=jax.ShapeDtypeStruct((OUT_CH, n_pad), jnp.float32),
        grid=grid,
        in_specs=[
            pl.BlockSpec((IN_FEATS, tile_m), lambda i: (0, i)),
            # Whole-array, constant-index blocks: DMA'd once, resident in VMEM.
            pl.BlockSpec((N_LAYERS, HIDDEN, HIDDEN), lambda i: (0, 0, 0)),
            pl.BlockSpec((N_LAYERS, HIDDEN, 1), lambda i: (0, 0, 0)),
        ],
        out_specs=pl.BlockSpec((OUT_CH, tile_m), lambda i: (0, i)),
        compiler_params=pltpu.CompilerParams(
            dimension_semantics=("parallel",)),
    )(xt, w_stack, b_stack)

    return out_t[:, :n].T                               # back to (N, OUT_CH)


def init_params(key):
    """PyTorch-style Linear init: U(-1/sqrt(fan_in), 1/sqrt(fan_in)).

    Returns a list of (W, b) with W in torch layout (out_features, in_features).
    """
    dims = [(HIDDEN, IN_FEATS)] + [(HIDDEN, HIDDEN)] * 8 + [(OUT_CH, HIDDEN)]
    params = []
    for fan_out, fan_in in dims:
        key, kw, kb = jax.random.split(key, 3)
        bound = 1.0 / float(fan_in) ** 0.5
        w = jax.random.uniform(kw, (fan_out, fan_in), jnp.float32, -bound, bound)
        b = jax.random.uniform(kb, (fan_out,), jnp.float32, -bound, bound)
        params.append((w, b))
    return params


def pack_params(params):
    """Pack all 10 (W, b) pairs into two padded stacks for the kernel."""
    assert len(params) == N_LAYERS and OUT_CH <= HIDDEN
    w_stack = jnp.zeros((N_LAYERS, HIDDEN, HIDDEN), jnp.float32)
    b_stack = jnp.zeros((N_LAYERS, HIDDEN, 1), jnp.float32)
    for i, (w, b) in enumerate(params):
        o, k = w.shape
        w_stack = w_stack.at[i, :o, :k].set(w.astype(jnp.float32))
        b_stack = b_stack.at[i, :o, 0].set(b.astype(jnp.float32))
    return w_stack, b_stack


def reference_forward(x, params):
    h = x
    for w, b in params[:-1]:
        h = jax.nn.sigmoid(h @ w.T + b)
    w, b = params[-1]
    out = h @ w.T + b
    return jnp.concatenate([jnp.exp(out[..., :3]), out[..., 3:] * 0.1], axis=-1)


if __name__ == "__main__":
    key = jax.random.PRNGKey(0)
    key, kx = jax.random.split(key)

    n = 300  # small batch of (E, Q^2)-like 2-feature rows (not a tile multiple)
    x = jax.random.uniform(kx, (n, IN_FEATS), jnp.float32, 0.0, 1.0)
    params = init_params(key)
    w_stack, b_stack = pack_params(params)

    y_ref = reference_forward(x, params)

    # Default (large single tile) and an explicit multi-step grid with padding.
    y = jax.block_until_ready(structure_function_net(x, w_stack, b_stack))
    y2 = jax.block_until_ready(
        structure_function_net(x, w_stack, b_stack, tile_m=128))

    assert y.shape == (n, OUT_CH)
    assert jnp.allclose(y, y_ref, rtol=1e-4, atol=1e-5), "mismatch vs reference"
    assert jnp.allclose(y2, y_ref, rtol=1e-4, atol=1e-5), "mismatch (tiled) vs reference"

    print("KERNEL_OK")
</pallas_src>

<mosaic_0001>
module attributes {stable_mosaic.version = 11 : i64} {
  func.func @_mlp_kernel(%arg0: i32, %arg1: memref<2x384xf32, #tpu.memory_space<vmem>>, %arg2: memref<10x20x20xf32, #tpu.memory_space<vmem>>, %arg3: memref<10x20x1xf32, #tpu.memory_space<vmem>>, %arg4: memref<6x384xf32, #tpu.memory_space<vmem>>) attributes {dimension_semantics = [#tpu.dimension_semantics<parallel>], iteration_bounds = array<i64: 1>, scalar_prefetch = 0 : i64, scratch_operands = 0 : i64, tpu.core_type = #tpu.core_type<tc>, window_params = [{transform_indices = @transform_0, window_bounds = array<i64: 2, 384>}, {pipeline_mode = #tpu.pipeline_mode<synchronous>, transform_indices = @transform_1, window_bounds = array<i64: 10, 20, 20>}, {pipeline_mode = #tpu.pipeline_mode<synchronous>, transform_indices = @transform_2, window_bounds = array<i64: 10, 20, 1>}, {transform_indices = @transform_3, window_bounds = array<i64: 6, 384>}]} {
    %c0 = arith.constant 0 : index
    %c0_0 = arith.constant 0 : index
    %0 = vector.load %arg1[%c0, %c0_0] : memref<2x384xf32, #tpu.memory_space<vmem>>, vector<2x384xf32>
    %c0_1 = arith.constant 0 : index
    %c0_2 = arith.constant 0 : index
    %c0_3 = arith.constant 0 : index
    %1 = vector.load %arg2[%c0_1, %c0_2, %c0_3] : memref<10x20x20xf32, #tpu.memory_space<vmem>>, vector<1x20x20xf32>
    %2 = vector.shape_cast %1 : vector<1x20x20xf32> to vector<20x20xf32>
    %3 = vector.extract_strided_slice %2 {offsets = [0, 0], sizes = [20, 2], strides = [1, 1]} : vector<20x20xf32> to vector<20x2xf32>
    %cst = arith.constant dense<0.000000e+00> : vector<20x384xf32>
    %4 = tpu.matmul %3, %0, %cst {dimension_numbers = #tpu.dot_dimension_numbers<[1], [0], [0], [1], [0, 0, 1, 1], [], []>} : vector<20x2xf32>, vector<2x384xf32>, vector<20x384xf32> -> vector<20x384xf32>
    %c0_4 = arith.constant 0 : index
    %c0_5 = arith.constant 0 : index
    %c0_6 = arith.constant 0 : index
    %5 = vector.load %arg3[%c0_4, %c0_5, %c0_6] : memref<10x20x1xf32, #tpu.memory_space<vmem>>, vector<1x20x1xf32>
    %6 = vector.shape_cast %5 : vector<1x20x1xf32> to vector<20x1xf32>
    %7 = vector.broadcast %6 : vector<20x1xf32> to vector<20x384xf32>
    %8 = arith.addf %4, %7 : vector<20x384xf32>
    %9 = arith.negf %8 : vector<20x384xf32>
    %10 = math.exp %9 : vector<20x384xf32>
    %cst_7 = arith.constant 1.000000e+00 : f32
    %11 = vector.broadcast %cst_7 : f32 to vector<20x384xf32>
    %12 = arith.addf %11, %10 : vector<20x384xf32>
    %13 = arith.divf %11, %12 : vector<20x384xf32>
    %c1 = arith.constant 1 : index
    %c0_8 = arith.constant 0 : index
    %c0_9 = arith.constant 0 : index
    %14 = vector.load %arg2[%c1, %c0_8, %c0_9] : memref<10x20x20xf32, #tpu.memory_space<vmem>>, vector<1x20x20xf32>
    %15 = vector.shape_cast %14 : vector<1x20x20xf32> to vector<20x20xf32>
    %cst_10 = arith.constant dense<0.000000e+00> : vector<20x384xf32>
    %16 = tpu.matmul %15, %13, %cst_10 {dimension_numbers = #tpu.dot_dimension_numbers<[1], [0], [0], [1], [0, 0, 1, 1], [], []>} : vector<20x20xf32>, vector<20x384xf32>, vector<20x384xf32> -> vector<20x384xf32>
    %c1_11 = arith.constant 1 : index
    %c0_12 = arith.constant 0 : index
    %c0_13 = arith.constant 0 : index
    %17 = vector.load %arg3[%c1_11, %c0_12, %c0_13] : memref<10x20x1xf32, #tpu.memory_space<vmem>>, vector<1x20x1xf32>
    %18 = vector.shape_cast %17 : vector<1x20x1xf32> to vector<20x1xf32>
    %19 = vector.broadcast %18 : vector<20x1xf32> to vector<20x384xf32>
    %20 = arith.addf %16, %19 : vector<20x384xf32>
    %21 = arith.negf %20 : vector<20x384xf32>
    %22 = math.exp %21 : vector<20x384xf32>
    %cst_14 = arith.constant 1.000000e+00 : f32
    %23 = vector.broadcast %cst_14 : f32 to vector<20x384xf32>
    %24 = arith.addf %23, %22 : vector<20x384xf32>
    %25 = arith.divf %23, %24 : vector<20x384xf32>
    %c2 = arith.constant 2 : index
    %c0_15 = arith.constant 0 : index
    %c0_16 = arith.constant 0 : index
    %26 = vector.load %arg2[%c2, %c0_15, %c0_16] : memref<10x20x20xf32, #tpu.memory_space<vmem>>, vector<1x20x20xf32>
    %27 = vector.shape_cast %26 : vector<1x20x20xf32> to vector<20x20xf32>
    %cst_17 = arith.constant dense<0.000000e+00> : vector<20x384xf32>
    %28 = tpu.matmul %27, %25, %cst_17 {dimension_numbers = #tpu.dot_dimension_numbers<[1], [0], [0], [1], [0, 0, 1, 1], [], []>} : vector<20x20xf32>, vector<20x384xf32>, vector<20x384xf32> -> vector<20x384xf32>
    %c2_18 = arith.constant 2 : index
    %c0_19 = arith.constant 0 : index
    %c0_20 = arith.constant 0 : index
    %29 = vector.load %arg3[%c2_18, %c0_19, %c0_20] : memref<10x20x1xf32, #tpu.memory_space<vmem>>, vector<1x20x1xf32>
    %30 = vector.shape_cast %29 : vector<1x20x1xf32> to vector<20x1xf32>
    %31 = vector.broadcast %30 : vector<20x1xf32> to vector<20x384xf32>
    %32 = arith.addf %28, %31 : vector<20x384xf32>
    %33 = arith.negf %32 : vector<20x384xf32>
    %34 = math.exp %33 : vector<20x384xf32>
    %cst_21 = arith.constant 1.000000e+00 : f32
    %35 = vector.broadcast %cst_21 : f32 to vector<20x384xf32>
    %36 = arith.addf %35, %34 : vector<20x384xf32>
    %37 = arith.divf %35, %36 : vector<20x384xf32>
    %c3 = arith.constant 3 : index
    %c0_22 = arith.constant 0 : index
    %c0_23 = arith.constant 0 : index
    %38 = vector.load %arg2[%c3, %c0_22, %c0_23] : memref<10x20x20xf32, #tpu.memory_space<vmem>>, vector<1x20x20xf32>
    %39 = vector.shape_cast %38 : vector<1x20x20xf32> to vector<20x20xf32>
    %cst_24 = arith.constant dense<0.000000e+00> : vector<20x384xf32>
    %40 = tpu.matmul %39, %37, %cst_24 {dimension_numbers = #tpu.dot_dimension_numbers<[1], [0], [0], [1], [0, 0, 1, 1], [], []>} : vector<20x20xf32>, vector<20x384xf32>, vector<20x384xf32> -> vector<20x384xf32>
    %c3_25 = arith.constant 3 : index
    %c0_26 = arith.constant 0 : index
    %c0_27 = arith.constant 0 : index
    %41 = vector.load %arg3[%c3_25, %c0_26, %c0_27] : memref<10x20x1xf32, #tpu.memory_space<vmem>>, vector<1x20x1xf32>
    %42 = vector.shape_cast %41 : vector<1x20x1xf32> to vector<20x1xf32>
    %43 = vector.broadcast %42 : vector<20x1xf32> to vector<20x384xf32>
    %44 = arith.addf %40, %43 : vector<20x384xf32>
    %45 = arith.negf %44 : vector<20x384xf32>
    %46 = math.exp %45 : vector<20x384xf32>
    %cst_28 = arith.constant 1.000000e+00 : f32
    %47 = vector.broadcast %cst_28 : f32 to vector<20x384xf32>
    %48 = arith.addf %47, %46 : vector<20x384xf32>
    %49 = arith.divf %47, %48 : vector<20x384xf32>
    %c4 = arith.constant 4 : index
    %c0_29 = arith.constant 0 : index
    %c0_30 = arith.constant 0 : index
    %50 = vector.load %arg2[%c4, %c0_29, %c0_30] : memref<10x20x20xf32, #tpu.memory_space<vmem>>, vector<1x20x20xf32>
    %51 = vector.shape_cast %50 : vector<1x20x20xf32> to vector<20x20xf32>
    %cst_31 = arith.constant dense<0.000000e+00> : vector<20x384xf32>
    %52 = tpu.matmul %51, %49, %cst_31 {dimension_numbers = #tpu.dot_dimension_numbers<[1], [0], [0], [1], [0, 0, 1, 1], [], []>} : vector<20x20xf32>, vector<20x384xf32>, vector<20x384xf32> -> vector<20x384xf32>
    %c4_32 = arith.constant 4 : index
    %c0_33 = arith.constant 0 : index
    %c0_34 = arith.constant 0 : index
    %53 = vector.load %arg3[%c4_32, %c0_33, %c0_34] : memref<10x20x1xf32, #tpu.memory_space<vmem>>, vector<1x20x1xf32>
    %54 = vector.shape_cast %53 : vector<1x20x1xf32> to vector<20x1xf32>
    %55 = vector.broadcast %54 : vector<20x1xf32> to vector<20x384xf32>
    %56 = arith.addf %52, %55 : vector<20x384xf32>
    %57 = arith.negf %56 : vector<20x384xf32>
    %58 = math.exp %57 : vector<20x384xf32>
    %cst_35 = arith.constant 1.000000e+00 : f32
    %59 = vector.broadcast %cst_35 : f32 to vector<20x384xf32>
    %60 = arith.addf %59, %58 : vector<20x384xf32>
    %61 = arith.divf %59, %60 : vector<20x384xf32>
    %c5 = arith.constant 5 : index
    %c0_36 = arith.constant 0 : index
    %c0_37 = arith.constant 0 : index
    %62 = vector.load %arg2[%c5, %c0_36, %c0_37] : memref<10x20x20xf32, #tpu.memory_space<vmem>>, vector<1x20x20xf32>
    %63 = vector.shape_cast %62 : vector<1x20x20xf32> to vector<20x20xf32>
    %cst_38 = arith.constant dense<0.000000e+00> : vector<20x384xf32>
    %64 = tpu.matmul %63, %61, %cst_38 {dimension_numbers = #tpu.dot_dimension_numbers<[1], [0], [0], [1], [0, 0, 1, 1], [], []>} : vector<20x20xf32>, vector<20x384xf32>, vector<20x384xf32> -> vector<20x384xf32>
    %c5_39 = arith.constant 5 : index
    %c0_40 = arith.constant 0 : index
    %c0_41 = arith.constant 0 : index
    %65 = vector.load %arg3[%c5_39, %c0_40, %c0_41] : memref<10x20x1xf32, #tpu.memory_space<vmem>>, vector<1x20x1xf32>
    %66 = vector.shape_cast %65 : vector<1x20x1xf32> to vector<20x1xf32>
    %67 = vector.broadcast %66 : vector<20x1xf32> to vector<20x384xf32>
    %68 = arith.addf %64, %67 : vector<20x384xf32>
    %69 = arith.negf %68 : vector<20x384xf32>
    %70 = math.exp %69 : vector<20x384xf32>
    %cst_42 = arith.constant 1.000000e+00 : f32
    %71 = vector.broadcast %cst_42 : f32 to vector<20x384xf32>
    %72 = arith.addf %71, %70 : vector<20x384xf32>
    %73 = arith.divf %71, %72 : vector<20x384xf32>
    %c6 = arith.constant 6 : index
    %c0_43 = arith.constant 0 : index
    %c0_44 = arith.constant 0 : index
    %74 = vector.load %arg2[%c6, %c0_43, %c0_44] : memref<10x20x20xf32, #tpu.memory_space<vmem>>, vector<1x20x20xf32>
    %75 = vector.shape_cast %74 : vector<1x20x20xf32> to vector<20x20xf32>
    %cst_45 = arith.constant dense<0.000000e+00> : vector<20x384xf32>
    %76 = tpu.matmul %75, %73, %cst_45 {dimension_numbers = #tpu.dot_dimension_numbers<[1], [0], [0], [1], [0, 0, 1, 1], [], []>} : vector<20x20xf32>, vector<20x384xf32>, vector<20x384xf32> -> vector<20x384xf32>
    %c6_46 = arith.constant 6 : index
    %c0_47 = arith.constant 0 : index
    %c0_48 = arith.constant 0 : index
    %77 = vector.load %arg3[%c6_46, %c0_47, %c0_48] : memref<10x20x1xf32, #tpu.memory_space<vmem>>, vector<1x20x1xf32>
    %78 = vector.shape_cast %77 : vector<1x20x1xf32> to vector<20x1xf32>
    %79 = vector.broadcast %78 : vector<20x1xf32> to vector<20x384xf32>
    %80 = arith.addf %76, %79 : vector<20x384xf32>
    %81 = arith.negf %80 : vector<20x384xf32>
    %82 = math.exp %81 : vector<20x384xf32>
    %cst_49 = arith.constant 1.000000e+00 : f32
    %83 = vector.broadcast %cst_49 : f32 to vector<20x384xf32>
    %84 = arith.addf %83, %82 : vector<20x384xf32>
    %85 = arith.divf %83, %84 : vector<20x384xf32>
    %c7 = arith.constant 7 : index
    %c0_50 = arith.constant 0 : index
    %c0_51 = arith.constant 0 : index
    %86 = vector.load %arg2[%c7, %c0_50, %c0_51] : memref<10x20x20xf32, #tpu.memory_space<vmem>>, vector<1x20x20xf32>
    %87 = vector.shape_cast %86 : vector<1x20x20xf32> to vector<20x20xf32>
    %cst_52 = arith.constant dense<0.000000e+00> : vector<20x384xf32>
    %88 = tpu.matmul %87, %85, %cst_52 {dimension_numbers = #tpu.dot_dimension_numbers<[1], [0], [0], [1], [0, 0, 1, 1], [], []>} : vector<20x20xf32>, vector<20x384xf32>, vector<20x384xf32> -> vector<20x384xf32>
    %c7_53 = arith.constant 7 : index
    %c0_54 = arith.constant 0 : index
    %c0_55 = arith.constant 0 : index
    %89 = vector.load %arg3[%c7_53, %c0_54, %c0_55] : memref<10x20x1xf32, #tpu.memory_space<vmem>>, vector<1x20x1xf32>
    %90 = vector.shape_cast %89 : vector<1x20x1xf32> to vector<20x1xf32>
    %91 = vector.broadcast %90 : vector<20x1xf32> to vector<20x384xf32>
    %92 = arith.addf %88, %91 : vector<20x384xf32>
    %93 = arith.negf %92 : vector<20x384xf32>
    %94 = math.exp %93 : vector<20x384xf32>
    %cst_56 = arith.constant 1.000000e+00 : f32
    %95 = vector.broadcast %cst_56 : f32 to vector<20x384xf32>
    %96 = arith.addf %95, %94 : vector<20x384xf32>
    %97 = arith.divf %95, %96 : vector<20x384xf32>
    %c8 = arith.constant 8 : index
    %c0_57 = arith.constant 0 : index
    %c0_58 = arith.constant 0 : index
    %98 = vector.load %arg2[%c8, %c0_57, %c0_58] : memref<10x20x20xf32, #tpu.memory_space<vmem>>, vector<1x20x20xf32>
    %99 = vector.shape_cast %98 : vector<1x20x20xf32> to vector<20x20xf32>
    %cst_59 = arith.constant dense<0.000000e+00> : vector<20x384xf32>
    %100 = tpu.matmul %99, %97, %cst_59 {dimension_numbers = #tpu.dot_dimension_numbers<[1], [0], [0], [1], [0, 0, 1, 1], [], []>} : vector<20x20xf32>, vector<20x384xf32>, vector<20x384xf32> -> vector<20x384xf32>
    %c8_60 = arith.constant 8 : index
    %c0_61 = arith.constant 0 : index
    %c0_62 = arith.constant 0 : index
    %101 = vector.load %arg3[%c8_60, %c0_61, %c0_62] : memref<10x20x1xf32, #tpu.memory_space<vmem>>, vector<1x20x1xf32>
    %102 = vector.shape_cast %101 : vector<1x20x1xf32> to vector<20x1xf32>
    %103 = vector.broadcast %102 : vector<20x1xf32> to vector<20x384xf32>
    %104 = arith.addf %100, %103 : vector<20x384xf32>
    %105 = arith.negf %104 : vector<20x384xf32>
    %106 = math.exp %105 : vector<20x384xf32>
    %cst_63 = arith.constant 1.000000e+00 : f32
    %107 = vector.broadcast %cst_63 : f32 to vector<20x384xf32>
    %108 = arith.addf %107, %106 : vector<20x384xf32>
    %109 = arith.divf %107, %108 : vector<20x384xf32>
    %c9 = arith.constant 9 : index
    %c0_64 = arith.constant 0 : index
    %c0_65 = arith.constant 0 : index
    %110 = vector.load %arg2[%c9, %c0_64, %c0_65] : memref<10x20x20xf32, #tpu.memory_space<vmem>>, vector<1x20x20xf32>
    %111 = vector.shape_cast %110 : vector<1x20x20xf32> to vector<20x20xf32>
    %cst_66 = arith.constant dense<0.000000e+00> : vector<20x384xf32>
    %112 = tpu.matmul %111, %109, %cst_66 {dimension_numbers = #tpu.dot_dimension_numbers<[1], [0], [0], [1], [0, 0, 1, 1], [], []>} : vector<20x20xf32>, vector<20x384xf32>, vector<20x384xf32> -> vector<20x384xf32>
    %c9_67 = arith.constant 9 : index
    %c0_68 = arith.constant 0 : index
    %c0_69 = arith.constant 0 : index
    %113 = vector.load %arg3[%c9_67, %c0_68, %c0_69] : memref<10x20x1xf32, #tpu.memory_space<vmem>>, vector<1x20x1xf32>
    %114 = vector.shape_cast %113 : vector<1x20x1xf32> to vector<20x1xf32>
    %115 = vector.broadcast %114 : vector<20x1xf32> to vector<20x384xf32>
    %116 = arith.addf %112, %115 : vector<20x384xf32>
    %117 = vector.extract_strided_slice %116 {offsets = [0, 0], sizes = [6, 384], strides = [1, 1]} : vector<20x384xf32> to vector<6x384xf32>
    %118 = tpu.iota {dimensions = array<i32: 0>} : vector<6x384xi32>
    %c3_i32 = arith.constant 3 : i32
    %119 = vector.broadcast %c3_i32 : i32 to vector<6x384xi32>
    %120 = arith.cmpi slt, %118, %119 : vector<6x384xi32>
    %121 = math.exp %117 : vector<6x384xf32>
    %cst_70 = arith.constant 1.000000e-01 : f32
    %122 = vector.broadcast %cst_70 : f32 to vector<6x384xf32>
    %123 = arith.mulf %117, %122 : vector<6x384xf32>
    %124 = arith.select %120, %121, %123 : vector<6x384xi1>, vector<6x384xf32>
    %c0_71 = arith.constant 0 : index
    %c0_72 = arith.constant 0 : index
    %125 = vector.load %arg4[%c0_71, %c0_72] : memref<6x384xf32, #tpu.memory_space<vmem>>, vector<6x384xf32>
    tpu.vector_store %arg4[%c0_71, %c0_72], %124 {strides = array<i32>} : memref<6x384xf32, #tpu.memory_space<vmem>>, vector<6x384xf32>,
    return
  }
  func.func @transform_0(%arg0: i32) -> (i32, i32) {
    %c0_i32 = arith.constant 0 : i32
    %c0_i32_0 = arith.constant 0 : i32
    return %c0_i32, %arg0 : i32, i32
  }
  func.func @transform_1(%arg0: i32) -> (i32, i32, i32) {
    %c0_i32 = arith.constant 0 : i32
    %c0_i32_0 = arith.constant 0 : i32
    %c0_i32_1 = arith.constant 0 : i32
    %c0_i32_2 = arith.constant 0 : i32
    return %c0_i32, %c0_i32_0, %c0_i32_1 : i32, i32, i32
  }
  func.func @transform_2(%arg0: i32) -> (i32, i32, i32) {
    %c0_i32 = arith.constant 0 : i32
    %c0_i32_0 = arith.constant 0 : i32
    %c0_i32_1 = arith.constant 0 : i32
    %c0_i32_2 = arith.constant 0 : i32
    return %c0_i32, %c0_i32_0, %c0_i32_1 : i32, i32, i32
  }
  func.func @transform_3(%arg0: i32) -> (i32, i32) {
    %c0_i32 = arith.constant 0 : i32
    %c0_i32_0 = arith.constant 0 : i32
    return %c0_i32, %arg0 : i32, i32
  }
}

</mosaic_0001>

<llo_original>
// kernel: tpu_custom_call.1
$region0: #{tpu_custom_call.1}
  #allocation0 [shape = 'u32[]', space=smem, size = 0x4, offset = 0x4, fixed_abs, tag = 'smem constant byte address 0x4 - core index']
  #allocation1 [shape = 'u32[144,128]{1,0:T(1,128)}', space=vmem, size = 0x12000, scoped, tag = 'internal scratch']
  %s0 = inlined_call_operand.vmem [shape: f32[2,384], index: 0, kind: input, shape index: {}]
  %s1 = inlined_call_operand.vmem [shape: f32[10,20,20], index: 1, kind: input, shape index: {}]
  %s2 = inlined_call_operand.vmem [shape: f32[10,20,1], index: 2, kind: input, shape index: {}]
  %s3 = inlined_call_operand.hbm [shape: f32[6,384], index: 3, kind: output, shape index: {}]
  %s4 = sld [smem:[#allocation0]]
  $region22: #{tpu_custom_call.1} parent=0
    _
  %s6 = ssub.s32 1, %s4
  %s7 = scalar_select 0, %s6, %s4
  $region1: #{tpu_custom_call.1} parent=0
    #allocation2 [shape = 'u8[12288]{0}', space=vmem, size = 0x3000, scoped, tag = 'output window, operand 0, single buffered']
    #allocation3 [shape = 's32[1]{0}', space=sflag, size = 0x4, scoped, tag = 'scoped memory for tpu_custom_call.1']
    %8 = vsyncpa [#allocation3], 0
    // Predicated region
    $region2: #{tpu_custom_call.1} parent=1 // pred_check
      _
    $region3: #{tpu_custom_call.1} parent=1 // pred_check_branch
      %10 = sbr.rel (0) target = $region5
    $region4: #{tpu_custom_call.1} parent=1 // pred_region
      _
    $region5: #{tpu_custom_call.1} parent=1 // pred_fallthru
      _
    // Predicated region
    $region6: #{tpu_custom_call.1} parent=1 // pred_check
      _
    $region7: #{tpu_custom_call.1} parent=1 // pred_check_branch
      %12 = sbr.rel (0) target = $region9
    $region8: #{tpu_custom_call.1} parent=1 // pred_region
      _
    $region9: #{tpu_custom_call.1} parent=1 // pred_fallthru
      _
    // Predicated region
    $region10: #{tpu_custom_call.1} parent=1 // pred_check
      _
    $region11: #{tpu_custom_call.1} parent=1 // pred_check_branch
      %14 = sbr.rel (0) target = $region13
    $region12: #{tpu_custom_call.1} parent=1 // pred_region
      _
    $region13: #{tpu_custom_call.1} parent=1 // pred_fallthru
      _
    %v15 = vld [vmem:[%s0] sm:$0x3f]
    %v16 = vld [vmem:[%s1] sm:$0xff]
    %v17 = vld [vmem:[%s1 + $0x8] sm:$0xff]
    %v18 = vld [vmem:[%s1 + $0x10] sm:$0xf]
    %v19 = vld [vmem:[%s2] sm:$0xff]
    %v20 = vld [vmem:[%s2 + $0x8] sm:$0xff]
    %v21 = vld [vmem:[%s2 + $0x10] sm:$0xf]
    %23 = vset.pattern.permute.xlu0 0
    %24 = vperm.xlu0 %23, %v19
    %v25 = vpop.permute.xlu0 %24
    %28 = vset.pattern.permute.xlu0 0
    %29 = vperm.xlu0 %28, %v20
    %v30 = vpop.permute.xlu0 %29
    %33 = vset.pattern.permute.xlu0 0
    %34 = vperm.xlu0 %33, %v21
    %v35 = vpop.permute.xlu0 %34
    %v38 = vcombine.high %v15, %v15
    %v40 = vunpack.c.l.s4 1983009808
    %v41 = vunpack.c.0.s8 %v40
    %v42 = vlaneseq
    %v43 = vshrl.u32 %v42, 7
    %v44 = vsub.s32 %v41, %v43
    %v45 = vrot.slane %v15, %v44
    %v47 = vunpack.c.l.s4 1983009808
    %v48 = vunpack.c.0.s8 %v47
    %v49 = vlaneseq
    %v50 = vshrl.u32 %v49, 7
    %v51 = vsub.s32 %v48, %v50
    %v52 = vrot.slane %v38, %v51
    %v53 = vcombine.high %v45, %v45
    %vm54 = vcmask 15360
    %v56 = vsel %vm54, %v16, 0
    %v59 = vsel %vm54, %v17, 0
    %v62 = vsel %vm54, %v18, 0
    %vm64 = vcmask 1041408
    %v65 = vsel %vm64, %v45, 0
    %v67 = vsel %vm64, %v53, 0
    %v69 = vsel %vm64, %v52, 0
    %71 = vmatprep.subr.mxu0 %v67
    %72 = vmatpush1.msra.mxu0 %v65
    %73 = vmatprep.subr.mxu0 0.0
    %74 = vmatpush1.msra.mxu0 0.0
    %75 = vmatprep.subr.mxu0 0.0
    %76 = vmatpush1.msra.mxu0 0.0
    %77 = vmatprep.subr.mxu0 0.0
    %78 = vmatpush1.msra.mxu0 0.0
    %79 = vmatprep.subr.mxu0 0.0
    %80 = vmatpush1.msra.mxu0 0.0
    %81 = vmatprep.subr.mxu0 0.0
    %82 = vmatpush1.msra.mxu0 0.0
    %83 = vmatprep.subr.mxu0 0.0
    %84 = vmatpush1.msra.mxu0 0.0
    %85 = vmatprep.subr.mxu0 0.0
    %86 = vmatpush1.msra.mxu0 0.0
    %87 = vmatprep.subr.mxu0 0.0
    %88 = vmatpush1.msra.mxu0 0.0
    %89 = vmatprep.subr.mxu0 0.0
    %90 = vmatpush1.msra.mxu0 0.0
    %91 = vmatprep.subr.mxu0 0.0
    %92 = vmatpush1.msra.mxu0 0.0
    %93 = vmatprep.subr.mxu0 0.0
    %94 = vmatpush1.msra.mxu0 0.0
    %95 = vmatprep.subr.mxu0 0.0
    %96 = vmatpush1.msra.mxu0 0.0
    %97 = vmatprep.subr.mxu0 0.0
    %98 = vmatpush1.msra.mxu0 0.0
    %99 = vmatprep.subr.mxu0 0.0
    %100 = vmatpush1.msra.mxu0 0.0
    %101 = vmatprep.subr.mxu0 0.0
    %102 = vmatpush1.msra.mxu0 0.0
    %103 = vmatprep.subr.mxu0 0.0
    %104 = vmatpush1.msra.mxu0 0.0
    %105 = vmatprep.subr.mxu0 0.0
    %106 = vmatpush1.msra.mxu0 0.0
    %107 = vmatprep.subr.mxu0 0.0
    %108 = vmatpush1.msra.mxu0 0.0
    %109 = vmatprep.subr.mxu0 0.0
    %110 = vmatpush1.msra.mxu0 0.0
    %111 = vmatprep.subr.mxu0 0.0
    %112 = vmatpush1.msra.mxu0 0.0
    %113 = vmatprep.subr.mxu0 0.0
    %114 = vmatpush1.msra.mxu0 0.0
    %115 = vmatprep.subr.mxu0 0.0
    %116 = vmatpush1.msra.mxu0 0.0
    %117 = vmatprep.subr.mxu0 0.0
    %118 = vmatpush1.msra.mxu0 0.0
    %119 = vmatprep.subr.mxu0 0.0
    %120 = vmatpush1.msra.mxu0 0.0
    %121 = vmatprep.subr.mxu0 0.0
    %122 = vmatpush1.msra.mxu0 0.0
    %123 = vmatprep.subr.mxu0 0.0
    %124 = vmatpush1.msra.mxu0 0.0
    %125 = vmatprep.subr.mxu0 0.0
    %126 = vmatpush1.msra.mxu0 0.0
    %127 = vmatprep.subr.mxu0 0.0
    %128 = vmatpush1.msra.mxu0 0.0
    %129 = vmatprep.subr.mxu0 0.0
    %130 = vmatpush1.msra.mxu0 0.0
    %131 = vmatprep.subr.mxu0 0.0
    %132 = vmatpush1.msra.mxu0 0.0
    %133 = vmatprep.subr.mxu0 0.0
    %134 = vmatpush1.msra.mxu0 0.0
    %135 = vmatprep.mubr.f32.mxu0 0.0
    %136 = vmatmul.mubr.f32.gmra.mrb[0].mxu0 %v56
    %v137 = vpop.f32.mrb[0].mxu0
    %v138 = vadd.f32 %v25, %v137
    %v139 = vpop.f32.mrb[0].mxu0
    %v140 = vadd.f32 %v25, %v139
    %141 = vmatprep.mubr.f32.mxu0 0.0
    %142 = vmatmul.mubr.f32.gmra.mrb[0].mxu0 %v59
    %v143 = vpop.f32.mrb[0].mxu0
    %v144 = vadd.f32 %v30, %v143
    %v145 = vpop.f32.mrb[0].mxu0
    %v146 = vadd.f32 %v30, %v145
    %147 = vmatprep.mubr.f32.mxu0 0.0
    %148 = vmatmul.mubr.f32.gmra.mrb[0].mxu0 %v62
    %v149 = vpop.f32.mrb[0].mxu0
    %v150 = vadd.f32 %v35, %v149
    %v151 = vpop.f32.mrb[0].mxu0
    %v152 = vadd.f32 %v35, %v151
    %153 = vdwg.mxu0
    %154 = vmatprep.subr.mxu0 0.0
    %155 = vmatpush1.msra.mxu0 %v69
    %156 = vmatprep.subr.mxu0 0.0
    %157 = vmatpush1.msra.mxu0 0.0
    %158 = vmatprep.subr.mxu0 0.0
    %159 = vmatpush1.msra.mxu0 0.0
    %160 = vmatprep.subr.mxu0 0.0
    %161 = vmatpush1.msra.mxu0 0.0
    %162 = vmatprep.subr.mxu0 0.0
    %163 = vmatpush1.msra.mxu0 0.0
    %164 = vmatprep.subr.mxu0 0.0
    %165 = vmatpush1.msra.mxu0 0.0
    %166 = vmatprep.subr.mxu0 0.0
    %167 = vmatpush1.msra.mxu0 0.0
    %168 = vmatprep.subr.mxu0 0.0
    %169 = vmatpush1.msra.mxu0 0.0
    %170 = vmatprep.subr.mxu0 0.0
    %171 = vmatpush1.msra.mxu0 0.0
    %172 = vmatprep.subr.mxu0 0.0
    %173 = vmatpush1.msra.mxu0 0.0
    %174 = vmatprep.subr.mxu0 0.0
    %175 = vmatpush1.msra.mxu0 0.0
    %176 = vmatprep.subr.mxu0 0.0
    %177 = vmatpush1.msra.mxu0 0.0
    %178 = vmatprep.subr.mxu0 0.0
    %179 = vmatpush1.msra.mxu0 0.0
    %180 = vmatprep.subr.mxu0 0.0
    %181 = vmatpush1.msra.mxu0 0.0
    %182 = vmatprep.subr.mxu0 0.0
    %183 = vmatpush1.msra.mxu0 0.0
    %184 = vmatprep.subr.mxu0 0.0
    %185 = vmatpush1.msra.mxu0 0.0
    %186 = vmatprep.subr.mxu0 0.0
    %187 = vmatpush1.msra.mxu0 0.0
    %188 = vmatprep.subr.mxu0 0.0
    %189 = vmatpush1.msra.mxu0 0.0
    %190 = vmatprep.subr.mxu0 0.0
    %191 = vmatpush1.msra.mxu0 0.0
    %192 = vmatprep.subr.mxu0 0.0
    %193 = vmatpush1.msra.mxu0 0.0
    %194 = vmatprep.subr.mxu0 0.0
    %195 = vmatpush1.msra.mxu0 0.0
    %196 = vmatprep.subr.mxu0 0.0
    %197 = vmatpush1.msra.mxu0 0.0
    %198 = vmatprep.subr.mxu0 0.0
    %199 = vmatpush1.msra.mxu0 0.0
    %200 = vmatprep.subr.mxu0 0.0
    %201 = vmatpush1.msra.mxu0 0.0
    %202 = vmatprep.subr.mxu0 0.0
    %203 = vmatpush1.msra.mxu0 0.0
    %204 = vmatprep.subr.mxu0 0.0
    %205 = vmatpush1.msra.mxu0 0.0
    %206 = vmatprep.subr.mxu0 0.0
    %207 = vmatpush1.msra.mxu0 0.0
    %208 = vmatprep.subr.mxu0 0.0
    %209 = vmatpush1.msra.mxu0 0.0
    %210 = vmatprep.subr.mxu0 0.0
    %211 = vmatpush1.msra.mxu0 0.0
    %212 = vmatprep.subr.mxu0 0.0
    %213 = vmatpush1.msra.mxu0 0.0
    %214 = vmatprep.subr.mxu0 0.0
    %215 = vmatpush1.msra.mxu0 0.0
    %216 = vmatprep.subr.mxu0 0.0
    %217 = vmatpush1.msra.mxu0 0.0
    %218 = vmatprep.mubr.f32.mxu0 0.0
    %219 = vmatmul.mubr.f32.gmra.mrb[0].mxu0 %v56
    %v220 = vpop.f32.mrb[0].mxu0
    %v221 = vadd.f32 %v25, %v220
    %v222 = vpop.f32.mrb[0].mxu0
    %223 = vmatprep.mubr.f32.mxu0 0.0
    %224 = vmatmul.mubr.f32.gmra.mrb[0].mxu0 %v59
    %v225 = vpop.f32.mrb[0].mxu0
    %v226 = vadd.f32 %v30, %v225
    %v227 = vpop.f32.mrb[0].mxu0
    %228 = vmatprep.mubr.f32.mxu0 0.0
    %229 = vmatmul.mubr.f32.gmra.mrb[0].mxu0 %v62
    %v230 = vpop.f32.mrb[0].mxu0
    %v231 = vadd.f32 %v35, %v230
    %v232 = vpop.f32.mrb[0].mxu0
    %233 = vdwg.mxu0
    %v234 = vxor.u32 %v138, 2147483648
    %v235 = vxor.u32 %v140, 2147483648
    %v236 = vxor.u32 %v221, 2147483648
    %v237 = vxor.u32 %v144, 2147483648
    %v238 = vxor.u32 %v146, 2147483648
    %v239 = vxor.u32 %v226, 2147483648
    %v240 = vxor.u32 %v150, 2147483648
    %v241 = vxor.u32 %v152, 2147483648
    %v242 = vxor.u32 %v231, 2147483648
    %v243 = vmul.f32 %v234, 1.442695
    %v244 = vpow.pop %v243
    %v245 = vmul.f32 %v235, 1.442695
    %v246 = vpow.pop %v245
    %v247 = vmul.f32 %v236, 1.442695
    %v248 = vpow.pop %v247
    %v249 = vmul.f32 %v237, 1.442695
    %v250 = vpow.pop %v249
    %v251 = vmul.f32 %v238, 1.442695
    %v252 = vpow.pop %v251
    %v253 = vmul.f32 %v239, 1.442695
    %v254 = vpow.pop %v253
    %v255 = vmul.f32 %v240, 1.442695
    %v256 = vpow.pop %v255
    %v257 = vmul.f32 %v241, 1.442695
    %v258 = vpow.pop %v257
    %v259 = vmul.f32 %v242, 1.442695
    %v260 = vpow.pop %v259
    %v261 = vadd.f32 %v244, 1.0
    %v262 = vadd.f32 %v246, 1.0
    %v263 = vadd.f32 %v248, 1.0
    %v264 = vadd.f32 %v250, 1.0
    %v265 = vadd.f32 %v252, 1.0
    %v266 = vadd.f32 %v254, 1.0
    %v267 = vadd.f32 %v256, 1.0
    %v268 = vadd.f32 %v258, 1.0
    %v269 = vadd.f32 %v260, 1.0
    %v270 = vrcp.pop %v261
    %v271 = vmul.f32 1.0, %v270
    %v272 = vrcp.pop %v262
    %v273 = vmul.f32 1.0, %v272
    %v274 = vrcp.pop %v263
    %v275 = vmul.f32 1.0, %v274
    %v276 = vrcp.pop %v264
    %v277 = vmul.f32 1.0, %v276
    %v278 = vrcp.pop %v265
    %v279 = vmul.f32 1.0, %v278
    %v280 = vrcp.pop %v266
    %v281 = vmul.f32 1.0, %v280
    %v282 = vrcp.pop %v267
    %v283 = vmul.f32 1.0, %v282
    %v284 = vrcp.pop %v268
    %v285 = vmul.f32 1.0, %v284
    %v286 = vrcp.pop %v269
    %v287 = vmul.f32 1.0, %v286
    %s288 = scalar_lea.vmem %s1, 24
    %v289 = vld [vmem:[%s288] sm:$0xff]
    %v290 = vld [vmem:[%s288 + $0x8] sm:$0xff]
    %v291 = vld [vmem:[%s288 + $0x10] sm:$0xf]
    %s292 = scalar_lea.vmem %s2, 24
    %v293 = vld [vmem:[%s292] sm:$0xff]
    %v294 = vld [vmem:[%s292 + $0x8] sm:$0xff]
    %v295 = vld [vmem:[%s292 + $0x10] sm:$0xf]
    %297 = vset.pattern.permute.xlu0 0
    %298 = vperm.xlu0 %297, %v293
    %v299 = vpop.permute.xlu0 %298
    %302 = vset.pattern.permute.xlu0 0
    %303 = vperm.xlu0 %302, %v294
    %v304 = vpop.permute.xlu0 %303
    %307 = vset.pattern.permute.xlu0 0
    %308 = vperm.xlu0 %307, %v295
    %v309 = vpop.permute.xlu0 %308
    %vm311 = vcmask 162816
    %v313 = vsel %vm311, %v289, 0
    %v316 = vsel %vm311, %v290, 0
    %v319 = vsel %vm311, %v291, 0
    %vm321 = vcmask 1043456
    %v323 = vsel %vm321, %v283, 0
    %v326 = vsel %vm321, %v285, 0
    %v329 = vsel %vm321, %v287, 0
    %331 = vmatprep.subr.mxu0 %v273
    %332 = vmatpush1.msra.mxu0 %v271
    %333 = vmatprep.subr.mxu0 %v279
    %334 = vmatpush1.msra.mxu0 %v277
    %335 = vmatprep.subr.mxu0 %v326
    %336 = vmatpush1.msra.mxu0 %v323
    %337 = vmatprep.subr.mxu0 0.0
    %338 = vmatpush1.msra.mxu0 0.0
    %339 = vmatprep.subr.mxu0 0.0
    %340 = vmatpush1.msra.mxu0 0.0
    %341 = vmatprep.subr.mxu0 0.0
    %342 = vmatpush1.msra.mxu0 0.0
    %343 = vmatprep.subr.mxu0 0.0
    %344 = vmatpush1.msra.mxu0 0.0
    %345 = vmatprep.subr.mxu0 0.0
    %346 = vmatpush1.msra.mxu0 0.0
    %347 = vmatprep.subr.mxu0 0.0
    %348 = vmatpush1.msra.mxu0 0.0
    %349 = vmatprep.subr.mxu0 0.0
    %350 = vmatpush1.msra.mxu0 0.0
    %351 = vmatprep.subr.mxu0 0.0
    %352 = vmatpush1.msra.mxu0 0.0
    %353 = vmatprep.subr.mxu0 0.0
    %354 = vmatpush1.msra.mxu0 0.0
    %355 = vmatprep.subr.mxu0 0.0
    %356 = vmatpush1.msra.mxu0 0.0
    %357 = vmatprep.subr.mxu0 0.0
    %358 = vmatpush1.msra.mxu0 0.0
    %359 = vmatprep.subr.mxu0 0.0
    %360 = vmatpush1.msra.mxu0 0.0
    %361 = vmatprep.subr.mxu0 0.0
    %362 = vmatpush1.msra.mxu0 0.0
    %363 = vmatprep.subr.mxu0 0.0
    %364 = vmatpush1.msra.mxu0 0.0
    %365 = vmatprep.subr.mxu0 0.0
    %366 = vmatpush1.msra.mxu0 0.0
    %367 = vmatprep.subr.mxu0 0.0
    %368 = vmatpush1.msra.mxu0 0.0
    %369 = vmatprep.subr.mxu0 0.0
    %370 = vmatpush1.msra.mxu0 0.0
    %371 = vmatprep.subr.mxu0 0.0
    %372 = vmatpush1.msra.mxu0 0.0
    %373 = vmatprep.subr.mxu0 0.0
    %374 = vmatpush1.msra.mxu0 0.0
    %375 = vmatprep.subr.mxu0 0.0
    %376 = vmatpush1.msra.mxu0 0.0
    %377 = vmatprep.subr.mxu0 0.0
    %378 = vmatpush1.msra.mxu0 0.0
    %379 = vmatprep.subr.mxu0 0.0
    %380 = vmatpush1.msra.mxu0 0.0
    %381 = vmatprep.subr.mxu0 0.0
    %382 = vmatpush1.msra.mxu0 0.0
    %383 = vmatprep.subr.mxu0 0.0
    %384 = vmatpush1.msra.mxu0 0.0
    %385 = vmatprep.subr.mxu0 0.0
    %386 = vmatpush1.msra.mxu0 0.0
    %387 = vmatprep.subr.mxu0 0.0
    %388 = vmatpush1.msra.mxu0 0.0
    %389 = vmatprep.subr.mxu0 0.0
    %390 = vmatpush1.msra.mxu0 0.0
    %391 = vmatprep.subr.mxu0 0.0
    %392 = vmatpush1.msra.mxu0 0.0
    %393 = vmatprep.subr.mxu0 0.0
    %394 = vmatpush1.msra.mxu0 0.0
    %395 = vmatprep.mubr.f32.mxu0 0.0
    %396 = vmatmul.mubr.f32.gmra.mrb[0].mxu0 %v313
    %v397 = vpop.f32.mrb[0].mxu0
    %v398 = vadd.f32 %v299, %v397
    %v399 = vpop.f32.mrb[0].mxu0
    %v400 = vadd.f32 %v299, %v399
    %401 = vmatprep.mubr.f32.mxu0 0.0
    %402 = vmatmul.mubr.f32.gmra.mrb[0].mxu0 %v316
    %v403 = vpop.f32.mrb[0].mxu0
    %v404 = vadd.f32 %v304, %v403
    %v405 = vpop.f32.mrb[0].mxu0
    %v406 = vadd.f32 %v304, %v405
    %407 = vmatprep.mubr.f32.mxu0 0.0
    %408 = vmatmul.mubr.f32.gmra.mrb[0].mxu0 %v319
    %v409 = vpop.f32.mrb[0].mxu0
    %v410 = vadd.f32 %v309, %v409
    %v411 = vpop.f32.mrb[0].mxu0
    %v412 = vadd.f32 %v309, %v411
    %413 = vdwg.mxu0
    %414 = vmatprep.subr.mxu0 0.0
    %415 = vmatpush1.msra.mxu0 %v275
    %416 = vmatprep.subr.mxu0 0.0
    %417 = vmatpush1.msra.mxu0 %v281
    %418 = vmatprep.subr.mxu0 0.0
    %419 = vmatpush1.msra.mxu0 %v329
    %420 = vmatprep.subr.mxu0 0.0
    %421 = vmatpush1.msra.mxu0 0.0
    %422 = vmatprep.subr.mxu0 0.0
    %423 = vmatpush1.msra.mxu0 0.0
    %424 = vmatprep.subr.mxu0 0.0
    %425 = vmatpush1.msra.mxu0 0.0
    %426 = vmatprep.subr.mxu0 0.0
    %427 = vmatpush1.msra.mxu0 0.0
    %428 = vmatprep.subr.mxu0 0.0
    %429 = vmatpush1.msra.mxu0 0.0
    %430 = vmatprep.subr.mxu0 0.0
    %431 = vmatpush1.msra.mxu0 0.0
    %432 = vmatprep.subr.mxu0 0.0
    %433 = vmatpush1.msra.mxu0 0.0
    %434 = vmatprep.subr.mxu0 0.0
    %435 = vmatpush1.msra.mxu0 0.0
    %436 = vmatprep.subr.mxu0 0.0
    %437 = vmatpush1.msra.mxu0 0.0
    %438 = vmatprep.subr.mxu0 0.0
    %439 = vmatpush1.msra.mxu0 0.0
    %440 = vmatprep.subr.mxu0 0.0
    %441 = vmatpush1.msra.mxu0 0.0
    %442 = vmatprep.subr.mxu0 0.0
    %443 = vmatpush1.msra.mxu0 0.0
    %444 = vmatprep.subr.mxu0 0.0
    %445 = vmatpush1.msra.mxu0 0.0
    %446 = vmatprep.subr.mxu0 0.0
    %447 = vmatpush1.msra.mxu0 0.0
    %448 = vmatprep.subr.mxu0 0.0
    %449 = vmatpush1.msra.mxu0 0.0
    %450 = vmatprep.subr.mxu0 0.0
    %451 = vmatpush1.msra.mxu0 0.0
    %452 = vmatprep.subr.mxu0 0.0
    %453 = vmatpush1.msra.mxu0 0.0
    %454 = vmatprep.subr.mxu0 0.0
    %455 = vmatpush1.msra.mxu0 0.0
    %456 = vmatprep.subr.mxu0 0.0
    %457 = vmatpush1.msra.mxu0 0.0
    %458 = vmatprep.subr.mxu0 0.0
    %459 = vmatpush1.msra.mxu0 0.0
    %460 = vmatprep.subr.mxu0 0.0
    %461 = vmatpush1.msra.mxu0 0.0
    %462 = vmatprep.subr.mxu0 0.0
    %463 = vmatpush1.msra.mxu0 0.0
    %464 = vmatprep.subr.mxu0 0.0
    %465 = vmatpush1.msra.mxu0 0.0
    %466 = vmatprep.subr.mxu0 0.0
    %467 = vmatpush1.msra.mxu0 0.0
    %468 = vmatprep.subr.mxu0 0.0
    %469 = vmatpush1.msra.mxu0 0.0
    %470 = vmatprep.subr.mxu0 0.0
    %471 = vmatpush1.msra.mxu0 0.0
    %472 = vmatprep.subr.mxu0 0.0
    %473 = vmatpush1.msra.mxu0 0.0
    %474 = vmatprep.subr.mxu0 0.0
    %475 = vmatpush1.msra.mxu0 0.0
    %476 = vmatprep.subr.mxu0 0.0
    %477 = vmatpush1.msra.mxu0 0.0
    %478 = vmatprep.mubr.f32.mxu0 0.0
    %479 = vmatmul.mubr.f32.gmra.mrb[0].mxu0 %v313
    %v480 = vpop.f32.mrb[0].mxu0
    %v481 = vadd.f32 %v299, %v480
    %v482 = vpop.f32.mrb[0].mxu0
    %483 = vmatprep.mubr.f32.mxu0 0.0
    %484 = vmatmul.mubr.f32.gmra.mrb[0].mxu0 %v316
    %v485 = vpop.f32.mrb[0].mxu0
    %v486 = vadd.f32 %v304, %v485
    %v487 = vpop.f32.mrb[0].mxu0
    %488 = vmatprep.mubr.f32.mxu0 0.0
    %489 = vmatmul.mubr.f32.gmra.mrb[0].mxu0 %v319
    %v490 = vpop.f32.mrb[0].mxu0
    %v491 = vadd.f32 %v309, %v490
    %v492 = vpop.f32.mrb[0].mxu0
    %493 = vdwg.mxu0
    %v494 = vxor.u32 %v398, 2147483648
    %v495 = vxor.u32 %v400, 2147483648
    %v496 = vxor.u32 %v481, 2147483648
    %v497 = vxor.u32 %v404, 2147483648
    %v498 = vxor.u32 %v406, 2147483648
    %v499 = vxor.u32 %v486, 2147483648
    %v500 = vxor.u32 %v410, 2147483648
    %v501 = vxor.u32 %v412, 2147483648
    %v502 = vxor.u32 %v491, 2147483648
    %v503 = vmul.f32 %v494, 1.442695
    %v504 = vpow.pop %v503
    %v505 = vmul.f32 %v495, 1.442695
    %v506 = vpow.pop %v505
    %v507 = vmul.f32 %v496, 1.442695
    %v508 = vpow.pop %v507
    %v509 = vmul.f32 %v497, 1.442695
    %v510 = vpow.pop %v509
    %v511 = vmul.f32 %v498, 1.442695
    %v512 = vpow.pop %v511
    %v513 = vmul.f32 %v499, 1.442695
    %v514 = vpow.pop %v513
    %v515 = vmul.f32 %v500, 1.442695
    %v516 = vpow.pop %v515
    %v517 = vmul.f32 %v501, 1.442695
    %v518 = vpow.pop %v517
    %v519 = vmul.f32 %v502, 1.442695
    %v520 = vpow.pop %v519
    %v521 = vadd.f32 %v504, 1.0
    %v522 = vadd.f32 %v506, 1.0
    %v523 = vadd.f32 %v508, 1.0
    %v524 = vadd.f32 %v510, 1.0
    %v525 = vadd.f32 %v512, 1.0
    %v526 = vadd.f32 %v514, 1.0
    %v527 = vadd.f32 %v516, 1.0
    %v528 = vadd.f32 %v518, 1.0
    %v529 = vadd.f32 %v520, 1.0
    %v530 = vrcp.pop %v521
    %v531 = vmul.f32 1.0, %v530
    %v532 = vrcp.pop %v522
    %v533 = vmul.f32 1.0, %v532
    %v534 = vrcp.pop %v523
    %v535 = vmul.f32 1.0, %v534
    %v536 = vrcp.pop %v524
    %v537 = vmul.f32 1.0, %v536
    %v538 = vrcp.pop %v525
    %v539 = vmul.f32 1.0, %v538
    %v540 = vrcp.pop %v526
    %v541 = vmul.f32 1.0, %v540
    %v542 = vrcp.pop %v527
    %v543 = vmul.f32 1.0, %v542
    %v544 = vrcp.pop %v528
    %v545 = vmul.f32 1.0, %v544
    %v546 = vrcp.pop %v529
    %v547 = vmul.f32 1.0, %v546
    %s548 = scalar_lea.vmem %s1, 48
    %v549 = vld [vmem:[%s548] sm:$0xff]
    %v550 = vld [vmem:[%s548 + $0x8] sm:$0xff]
    %v551 = vld [vmem:[%s548 + $0x10] sm:$0xf]
    %s552 = scalar_lea.vmem %s2, 48
    %v553 = vld [vmem:[%s552] sm:$0xff]
    %v554 = vld [vmem:[%s552 + $0x8] sm:$0xff]
    %v555 = vld [vmem:[%s552 + $0x10] sm:$0xf]
    %557 = vset.pattern.permute.xlu0 0
    %558 = vperm.xlu0 %557, %v553
    %v559 = vpop.permute.xlu0 %558
    %562 = vset.pattern.permute.xlu0 0
    %563 = vperm.xlu0 %562, %v554
    %v564 = vpop.permute.xlu0 %563
    %567 = vset.pattern.permute.xlu0 0
    %568 = vperm.xlu0 %567, %v555
    %v569 = vpop.permute.xlu0 %568
    %v572 = vsel %vm311, %v549, 0
    %v575 = vsel %vm311, %v550, 0
    %v578 = vsel %vm311, %v551, 0
    %v581 = vsel %vm321, %v543, 0
    %v584 = vsel %vm321, %v545, 0
    %v587 = vsel %vm321, %v547, 0
    %589 = vmatprep.subr.mxu0 %v533
    %590 = vmatpush1.msra.mxu0 %v531
    %591 = vmatprep.subr.mxu0 %v539
    %592 = vmatpush1.msra.mxu0 %v537
    %593 = vmatprep.subr.mxu0 %v584
    %594 = vmatpush1.msra.mxu0 %v581
    %595 = vmatprep.subr.mxu0 0.0
    %596 = vmatpush1.msra.mxu0 0.0
    %597 = vmatprep.subr.mxu0 0.0
    %598 = vmatpush1.msra.mxu0 0.0
    %599 = vmatprep.subr.mxu0 0.0
    %600 = vmatpush1.msra.mxu0 0.0
    %601 = vmatprep.subr.mxu0 0.0
    %602 = vmatpush1.msra.mxu0 0.0
    %603 = vmatprep.subr.mxu0 0.0
    %604 = vmatpush1.msra.mxu0 0.0
    %605 = vmatprep.subr.mxu0 0.0
    %606 = vmatpush1.msra.mxu0 0.0
    %607 = vmatprep.subr.mxu0 0.0
    %608 = vmatpush1.msra.mxu0 0.0
    %609 = vmatprep.subr.mxu0 0.0
    %610 = vmatpush1.msra.mxu0 0.0
    %611 = vmatprep.subr.mxu0 0.0
    %612 = vmatpush1.msra.mxu0 0.0
    %613 = vmatprep.subr.mxu0 0.0
    %614 = vmatpush1.msra.mxu0 0.0
    %615 = vmatprep.subr.mxu0 0.0
    %616 = vmatpush1.msra.mxu0 0.0
    %617 = vmatprep.subr.mxu0 0.0
    %618 = vmatpush1.msra.mxu0 0.0
    %619 = vmatprep.subr.mxu0 0.0
    %620 = vmatpush1.msra.mxu0 0.0
    %621 = vmatprep.subr.mxu0 0.0
    %622 = vmatpush1.msra.mxu0 0.0
    %623 = vmatprep.subr.mxu0 0.0
    %624 = vmatpush1.msra.mxu0 0.0
    %625 = vmatprep.subr.mxu0 0.0
    %626 = vmatpush1.msra.mxu0 0.0
    %627 = vmatprep.subr.mxu0 0.0
    %628 = vmatpush1.msra.mxu0 0.0
    %629 = vmatprep.subr.mxu0 0.0
    %630 = vmatpush1.msra.mxu0 0.0
    %631 = vmatprep.subr.mxu0 0.0
    %632 = vmatpush1.msra.mxu0 0.0
    %633 = vmatprep.subr.mxu0 0.0
    %634 = vmatpush1.msra.mxu0 0.0
    %635 = vmatprep.subr.mxu0 0.0
    %636 = vmatpush1.msra.mxu0 0.0
    %637 = vmatprep.subr.mxu0 0.0
    %638 = vmatpush1.msra.mxu0 0.0
    %639 = vmatprep.subr.mxu0 0.0
    %640 = vmatpush1.msra.mxu0 0.0
    %641 = vmatprep.subr.mxu0 0.0
    %642 = vmatpush1.msra.mxu0 0.0
    %643 = vmatprep.subr.mxu0 0.0
    %644 = vmatpush1.msra.mxu0 0.0
    %645 = vmatprep.subr.mxu0 0.0
    %646 = vmatpush1.msra.mxu0 0.0
    %647 = vmatprep.subr.mxu0 0.0
    %648 = vmatpush1.msra.mxu0 0.0
    %649 = vmatprep.subr.mxu0 0.0
    %650 = vmatpush1.msra.mxu0 0.0
    %651 = vmatprep.subr.mxu0 0.0
    %652 = vmatpush1.msra.mxu0 0.0
    %653 = vmatprep.mubr.f32.mxu0 0.0
    %654 = vmatmul.mubr.f32.gmra.mrb[0].mxu0 %v572
    %v655 = vpop.f32.mrb[0].mxu0
    %v656 = vadd.f32 %v559, %v655
    %v657 = vpop.f32.mrb[0].mxu0
    %v658 = vadd.f32 %v559, %v657
    %659 = vmatprep.mubr.f32.mxu0 0.0
    %660 = vmatmul.mubr.f32.gmra.mrb[0].mxu0 %v575
    %v661 = vpop.f32.mrb[0].mxu0
    %v662 = vadd.f32 %v564, %v661
    %v663 = vpop.f32.mrb[0].mxu0
    %v664 = vadd.f32 %v564, %v663
    %665 = vmatprep.mubr.f32.mxu0 0.0
    %666 = vmatmul.mubr.f32.gmra.mrb[0].mxu0 %v578
    %v667 = vpop.f32.mrb[0].mxu0
    %v668 = vadd.f32 %v569, %v667
    %v669 = vpop.f32.mrb[0].mxu0
    %v670 = vadd.f32 %v569, %v669
    %671 = vdwg.mxu0
    %672 = vmatprep.subr.mxu0 0.0
    %673 = vmatpush1.msra.mxu0 %v535
    %674 = vmatprep.subr.mxu0 0.0
    %675 = vmatpush1.msra.mxu0 %v541
    %676 = vmatprep.subr.mxu0 0.0
    %677 = vmatpush1.msra.mxu0 %v587
    %678 = vmatprep.subr.mxu0 0.0
    %679 = vmatpush1.msra.mxu0 0.0
    %680 = vmatprep.subr.mxu0 0.0
    %681 = vmatpush1.msra.mxu0 0.0
    %682 = vmatprep.subr.mxu0 0.0
    %683 = vmatpush1.msra.mxu0 0.0
    %684 = vmatprep.subr.mxu0 0.0
    %685 = vmatpush1.msra.mxu0 0.0
    %686 = vmatprep.subr.mxu0 0.0
    %687 = vmatpush1.msra.mxu0 0.0
    %688 = vmatprep.subr.mxu0 0.0
    %689 = vmatpush1.msra.mxu0 0.0
    %690 = vmatprep.subr.mxu0 0.0
    %691 = vmatpush1.msra.mxu0 0.0
    %692 = vmatprep.subr.mxu0 0.0
    %693 = vmatpush1.msra.mxu0 0.0
    %694 = vmatprep.subr.mxu0 0.0
    %695 = vmatpush1.msra.mxu0 0.0
    %696 = vmatprep.subr.mxu0 0.0
    %697 = vmatpush1.msra.mxu0 0.0
    %698 = vmatprep.subr.mxu0 0.0
    %699 = vmatpush1.msra.mxu0 0.0
    %700 = vmatprep.subr.mxu0 0.0
    %701 = vmatpush1.msra.mxu0 0.0
    %702 = vmatprep.subr.mxu0 0.0
    %703 = vmatpush1.msra.mxu0 0.0
    %704 = vmatprep.subr.mxu0 0.0
    %705 = vmatpush1.msra.mxu0 0.0
    %706 = vmatprep.subr.mxu0 0.0
    %707 = vmatpush1.msra.mxu0 0.0
    %708 = vmatprep.subr.mxu0 0.0
    %709 = vmatpush1.msra.mxu0 0.0
    %710 = vmatprep.subr.mxu0 0.0
    %711 = vmatpush1.msra.mxu0 0.0
    %712 = vmatprep.subr.mxu0 0.0
    %713 = vmatpush1.msra.mxu0 0.0
    %714 = vmatprep.subr.mxu0 0.0
    %715 = vmatpush1.msra.mxu0 0.0
    %716 = vmatprep.subr.mxu0 0.0
    %717 = vmatpush1.msra.mxu0 0.0
    %718 = vmatprep.subr.mxu0 0.0
    %719 = vmatpush1.msra.mxu0 0.0
    %720 = vmatprep.subr.mxu0 0.0
    %721 = vmatpush1.msra.mxu0 0.0
    %722 = vmatprep.subr.mxu0 0.0
    %723 = vmatpush1.msra.mxu0 0.0
    %724 = vmatprep.subr.mxu0 0.0
    %725 = vmatpush1.msra.mxu0 0.0
    %726 = vmatprep.subr.mxu0 0.0
    %727 = vmatpush1.msra.mxu0 0.0
    %728 = vmatprep.subr.mxu0 0.0
    %729 = vmatpush1.msra.mxu0 0.0
    %730 = vmatprep.subr.mxu0 0.0
    %731 = vmatpush1.msra.mxu0 0.0
    %732 = vmatprep.subr.mxu0 0.0
    %733 = vmatpush1.msra.mxu0 0.0
    %734 = vmatprep.subr.mxu0 0.0
    %735 = vmatpush1.msra.mxu0 0.0
    %736 = vmatprep.mubr.f32.mxu0 0.0
    %737 = vmatmul.mubr.f32.gmra.mrb[0].mxu0 %v572
    %v738 = vpop.f32.mrb[0].mxu0
    %v739 = vadd.f32 %v559, %v738
    %v740 = vpop.f32.mrb[0].mxu0
    %741 = vmatprep.mubr.f32.mxu0 0.0
    %742 = vmatmul.mubr.f32.gmra.mrb[0].mxu0 %v575
    %v743 = vpop.f32.mrb[0].mxu0
    %v744 = vadd.f32 %v564, %v743
    %v745 = vpop.f32.mrb[0].mxu0
    %746 = vmatprep.mubr.f32.mxu0 0.0
    %747 = vmatmul.mubr.f32.gmra.mrb[0].mxu0 %v578
    %v748 = vpop.f32.mrb[0].mxu0
    %v749 = vadd.f32 %v569, %v748
    %v750 = vpop.f32.mrb[0].mxu0
    %751 = vdwg.mxu0
    %v752 = vxor.u32 %v656, 2147483648
    %v753 = vxor.u32 %v658, 2147483648
    %v754 = vxor.u32 %v739, 2147483648
    %v755 = vxor.u32 %v662, 2147483648
    %v756 = vxor.u32 %v664, 2147483648
    %v757 = vxor.u32 %v744, 2147483648
    %v758 = vxor.u32 %v668, 2147483648
    %v759 = vxor.u32 %v670, 2147483648
    %v760 = vxor.u32 %v749, 2147483648
    %v761 = vmul.f32 %v752, 1.442695
    %v762 = vpow.pop %v761
    %v763 = vmul.f32 %v753, 1.442695
    %v764 = vpow.pop %v763
    %v765 = vmul.f32 %v754, 1.442695
    %v766 = vpow.pop %v765
    %v767 = vmul.f32 %v755, 1.442695
    %v768 = vpow.pop %v767
    %v769 = vmul.f32 %v756, 1.442695
    %v770 = vpow.pop %v769
    %v771 = vmul.f32 %v757, 1.442695
    %v772 = vpow.pop %v771
    %v773 = vmul.f32 %v758, 1.442695
    %v774 = vpow.pop %v773
    %v775 = vmul.f32 %v759, 1.442695
    %v776 = vpow.pop %v775
    %v777 = vmul.f32 %v760, 1.442695
    %v778 = vpow.pop %v777
    %v779 = vadd.f32 %v762, 1.0
    %v780 = vadd.f32 %v764, 1.0
    %v781 = vadd.f32 %v766, 1.0
    %v782 = vadd.f32 %v768, 1.0
    %v783 = vadd.f32 %v770, 1.0
    %v784 = vadd.f32 %v772, 1.0
    %v785 = vadd.f32 %v774, 1.0
    %v786 = vadd.f32 %v776, 1.0
    %v787 = vadd.f32 %v778, 1.0
    %v788 = vrcp.pop %v779
    %v789 = vmul.f32 1.0, %v788
    %v790 = vrcp.pop %v780
    %v791 = vmul.f32 1.0, %v790
    %v792 = vrcp.pop %v781
    %v793 = vmul.f32 1.0, %v792
    %v794 = vrcp.pop %v782
    %v795 = vmul.f32 1.0, %v794
    %v796 = vrcp.pop %v783
    %v797 = vmul.f32 1.0, %v796
    %v798 = vrcp.pop %v784
    %v799 = vmul.f32 1.0, %v798
    %v800 = vrcp.pop %v785
    %v801 = vmul.f32 1.0, %v800
    %v802 = vrcp.pop %v786
    %v803 = vmul.f32 1.0, %v802
    %v804 = vrcp.pop %v787
    %v805 = vmul.f32 1.0, %v804
    %s806 = scalar_lea.vmem %s1, 72
    %v807 = vld [vmem:[%s806] sm:$0xff]
    %v808 = vld [vmem:[%s806 + $0x8] sm:$0xff]
    %v809 = vld [vmem:[%s806 + $0x10] sm:$0xf]
    %s810 = scalar_lea.vmem %s2, 72
    %v811 = vld [vmem:[%s810] sm:$0xff]
    %v812 = vld [vmem:[%s810 + $0x8] sm:$0xff]
    %v813 = vld [vmem:[%s810 + $0x10] sm:$0xf]
    %815 = vset.pattern.permute.xlu0 0
    %816 = vperm.xlu0 %815, %v811
    %v817 = vpop.permute.xlu0 %816
    %820 = vset.pattern.permute.xlu0 0
    %821 = vperm.xlu0 %820, %v812
    %v822 = vpop.permute.xlu0 %821
    %825 = vset.pattern.permute.xlu0 0
    %826 = vperm.xlu0 %825, %v813
    %v827 = vpop.permute.xlu0 %826
    %v830 = vsel %vm311, %v807, 0
    %v833 = vsel %vm311, %v808, 0
    %v836 = vsel %vm311, %v809, 0
    %v839 = vsel %vm321, %v801, 0
    %v842 = vsel %vm321, %v803, 0
    %v845 = vsel %vm321, %v805, 0
    %847 = vmatprep.subr.mxu0 %v791
    %848 = vmatpush1.msra.mxu0 %v789
    %849 = vmatprep.subr.mxu0 %v797
    %850 = vmatpush1.msra.mxu0 %v795
    %851 = vmatprep.subr.mxu0 %v842
    %852 = vmatpush1.msra.mxu0 %v839
    %853 = vmatprep.subr.mxu0 0.0
    %854 = vmatpush1.msra.mxu0 0.0
    %855 = vmatprep.subr.mxu0 0.0
    %856 = vmatpush1.msra.mxu0 0.0
    %857 = vmatprep.subr.mxu0 0.0
    %858 = vmatpush1.msra.mxu0 0.0
    %859 = vmatprep.subr.mxu0 0.0
    %860 = vmatpush1.msra.mxu0 0.0
    %861 = vmatprep.subr.mxu0 0.0
    %862 = vmatpush1.msra.mxu0 0.0
    %863 = vmatprep.subr.mxu0 0.0
    %864 = vmatpush1.msra.mxu0 0.0
    %865 = vmatprep.subr.mxu0 0.0
    %866 = vmatpush1.msra.mxu0 0.0
    %867 = vmatprep.subr.mxu0 0.0
    %868 = vmatpush1.msra.mxu0 0.0
    %869 = vmatprep.subr.mxu0 0.0
    %870 = vmatpush1.msra.mxu0 0.0
    %871 = vmatprep.subr.mxu0 0.0
    %872 = vmatpush1.msra.mxu0 0.0
    %873 = vmatprep.subr.mxu0 0.0
    %874 = vmatpush1.msra.mxu0 0.0
    %875 = vmatprep.subr.mxu0 0.0
    %876 = vmatpush1.msra.mxu0 0.0
    %877 = vmatprep.subr.mxu0 0.0
    %878 = vmatpush1.msra.mxu0 0.0
    %879 = vmatprep.subr.mxu0 0.0
    %880 = vmatpush1.msra.mxu0 0.0
    %881 = vmatprep.subr.mxu0 0.0
    %882 = vmatpush1.msra.mxu0 0.0
    %883 = vmatprep.subr.mxu0 0.0
    %884 = vmatpush1.msra.mxu0 0.0
    %885 = vmatprep.subr.mxu0 0.0
    %886 = vmatpush1.msra.mxu0 0.0
    %887 = vmatprep.subr.mxu0 0.0
    %888 = vmatpush1.msra.mxu0 0.0
    %889 = vmatprep.subr.mxu0 0.0
    %890 = vmatpush1.msra.mxu0 0.0
    %891 = vmatprep.subr.mxu0 0.0
    %892 = vmatpush1.msra.mxu0 0.0
    %893 = vmatprep.subr.mxu0 0.0
    %894 = vmatpush1.msra.mxu0 0.0
    %895 = vmatprep.subr.mxu0 0.0
    %896 = vmatpush1.msra.mxu0 0.0
    %897 = vmatprep.subr.mxu0 0.0
    %898 = vmatpush1.msra.mxu0 0.0
    %899 = vmatprep.subr.mxu0 0.0
    %900 = vmatpush1.msra.mxu0 0.0
    %901 = vmatprep.subr.mxu0 0.0
    %902 = vmatpush1.msra.mxu0 0.0
    %903 = vmatprep.subr.mxu0 0.0
    %904 = vmatpush1.msra.mxu0 0.0
    %905 = vmatprep.subr.mxu0 0.0
    %906 = vmatpush1.msra.mxu0 0.0
    %907 = vmatprep.subr.mxu0 0.0
    %908 = vmatpush1.msra.mxu0 0.0
    %909 = vmatprep.subr.mxu0 0.0
    %910 = vmatpush1.msra.mxu0 0.0
    %911 = vmatprep.mubr.f32.mxu0 0.0
    %912 = vmatmul.mubr.f32.gmra.mrb[0].mxu0 %v830
    %v913 = vpop.f32.mrb[0].mxu0
    %v914 = vadd.f32 %v817, %v913
    %v915 = vpop.f32.mrb[0].mxu0
    %v916 = vadd.f32 %v817, %v915
    %917 = vmatprep.mubr.f32.mxu0 0.0
    %918 = vmatmul.mubr.f32.gmra.mrb[0].mxu0 %v833
    %v919 = vpop.f32.mrb[0].mxu0
    %v920 = vadd.f32 %v822, %v919
    %v921 = vpop.f32.mrb[0].mxu0
    %v922 = vadd.f32 %v822, %v921
    %923 = vmatprep.mubr.f32.mxu0 0.0
    %924 = vmatmul.mubr.f32.gmra.mrb[0].mxu0 %v836
    %v925 = vpop.f32.mrb[0].mxu0
    %v926 = vadd.f32 %v827, %v925
    %v927 = vpop.f32.mrb[0].mxu0
    %v928 = vadd.f32 %v827, %v927
    %929 = vdwg.mxu0
    %930 = vmatprep.subr.mxu0 0.0
    %931 = vmatpush1.msra.mxu0 %v793
    %932 = vmatprep.subr.mxu0 0.0
    %933 = vmatpush1.msra.mxu0 %v799
    %934 = vmatprep.subr.mxu0 0.0
    %935 = vmatpush1.msra.mxu0 %v845
    %936 = vmatprep.subr.mxu0 0.0
    %937 = vmatpush1.msra.mxu0 0.0
    %938 = vmatprep.subr.mxu0 0.0
    %939 = vmatpush1.msra.mxu0 0.0
    %940 = vmatprep.subr.mxu0 0.0
    %941 = vmatpush1.msra.mxu0 0.0
    %942 = vmatprep.subr.mxu0 0.0
    %943 = vmatpush1.msra.mxu0 0.0
    %944 = vmatprep.subr.mxu0 0.0
    %945 = vmatpush1.msra.mxu0 0.0
    %946 = vmatprep.subr.mxu0 0.0
    %947 = vmatpush1.msra.mxu0 0.0
    %948 = vmatprep.subr.mxu0 0.0
    %949 = vmatpush1.msra.mxu0 0.0
    %950 = vmatprep.subr.mxu0 0.0
    %951 = vmatpush1.msra.mxu0 0.0
    %952 = vmatprep.subr.mxu0 0.0
    %953 = vmatpush1.msra.mxu0 0.0
    %954 = vmatprep.subr.mxu0 0.0
    %955 = vmatpush1.msra.mxu0 0.0
    %956 = vmatprep.subr.mxu0 0.0
    %957 = vmatpush1.msra.mxu0 0.0
    %958 = vmatprep.subr.mxu0 0.0
    %959 = vmatpush1.msra.mxu0 0.0
    %960 = vmatprep.subr.mxu0 0.0
    %961 = vmatpush1.msra.mxu0 0.0
    %962 = vmatprep.subr.mxu0 0.0
    %963 = vmatpush1.msra.mxu0 0.0
    %964 = vmatprep.subr.mxu0 0.0
    %965 = vmatpush1.msra.mxu0 0.0
    %966 = vmatprep.subr.mxu0 0.0
    %967 = vmatpush1.msra.mxu0 0.0
    %968 = vmatprep.subr.mxu0 0.0
    %969 = vmatpush1.msra.mxu0 0.0
    %970 = vmatprep.subr.mxu0 0.0
    %971 = vmatpush1.msra.mxu0 0.0
    %972 = vmatprep.subr.mxu0 0.0
    %973 = vmatpush1.msra.mxu0 0.0
    %974 = vmatprep.subr.mxu0 0.0
    %975 = vmatpush1.msra.mxu0 0.0
    %976 = vmatprep.subr.mxu0 0.0
    %977 = vmatpush1.msra.mxu0 0.0
    %978 = vmatprep.subr.mxu0 0.0
    %979 = vmatpush1.msra.mxu0 0.0
    %980 = vmatprep.subr.mxu0 0.0
    %981 = vmatpush1.msra.mxu0 0.0
    %982 = vmatprep.subr.mxu0 0.0
    %983 = vmatpush1.msra.mxu0 0.0
    %984 = vmatprep.subr.mxu0 0.0
    %985 = vmatpush1.msra.mxu0 0.0
    %986 = vmatprep.subr.mxu0 0.0
    %987 = vmatpush1.msra.mxu0 0.0
    %988 = vmatprep.subr.mxu0 0.0
    %989 = vmatpush1.msra.mxu0 0.0
    %990 = vmatprep.subr.mxu0 0.0
    %991 = vmatpush1.msra.mxu0 0.0
    %992 = vmatprep.subr.mxu0 0.0
    %993 = vmatpush1.msra.mxu0 0.0
    %994 = vmatprep.mubr.f32.mxu0 0.0
    %995 = vmatmul.mubr.f32.gmra.mrb[0].mxu0 %v830
    %v996 = vpop.f32.mrb[0].mxu0
    %v997 = vadd.f32 %v817, %v996
    %v998 = vpop.f32.mrb[0].mxu0
    %999 = vmatprep.mubr.f32.mxu0 0.0
    %1000 = vmatmul.mubr.f32.gmra.mrb[0].mxu0 %v833
    %v1001 = vpop.f32.mrb[0].mxu0
    %v1002 = vadd.f32 %v822, %v1001
    %v1003 = vpop.f32.mrb[0].mxu0
    %1004 = vmatprep.mubr.f32.mxu0 0.0
    %1005 = vmatmul.mubr.f32.gmra.mrb[0].mxu0 %v836
    %v1006 = vpop.f32.mrb[0].mxu0
    %v1007 = vadd.f32 %v827, %v1006
    %v1008 = vpop.f32.mrb[0].mxu0
    %1009 = vdwg.mxu0
    %v1010 = vxor.u32 %v914, 2147483648
    %v1011 = vxor.u32 %v916, 2147483648
    %v1012 = vxor.u32 %v997, 2147483648
    %v1013 = vxor.u32 %v920, 2147483648
    %v1014 = vxor.u32 %v922, 2147483648
    %v1015 = vxor.u32 %v1002, 2147483648
    %v1016 = vxor.u32 %v926, 2147483648
    %v1017 = vxor.u32 %v928, 2147483648
    %v1018 = vxor.u32 %v1007, 2147483648
    %v1019 = vmul.f32 %v1010, 1.442695
    %v1020 = vpow.pop %v1019
    %v1021 = vmul.f32 %v1011, 1.442695
    %v1022 = vpow.pop %v1021
    %v1023 = vmul.f32 %v1012, 1.442695
    %v1024 = vpow.pop %v1023
    %v1025 = vmul.f32 %v1013, 1.442695
    %v1026 = vpow.pop %v1025
    %v1027 = vmul.f32 %v1014, 1.442695
    %v1028 = vpow.pop %v1027
    %v1029 = vmul.f32 %v1015, 1.442695
    %v1030 = vpow.pop %v1029
    %v1031 = vmul.f32 %v1016, 1.442695
    %v1032 = vpow.pop %v1031
    %v1033 = vmul.f32 %v1017, 1.442695
    %v1034 = vpow.pop %v1033
    %v1035 = vmul.f32 %v1018, 1.442695
    %v1036 = vpow.pop %v1035
    %v1037 = vadd.f32 %v1020, 1.0
    %v1038 = vadd.f32 %v1022, 1.0
    %v1039 = vadd.f32 %v1024, 1.0
    %v1040 = vadd.f32 %v1026, 1.0
    %v1041 = vadd.f32 %v1028, 1.0
    %v1042 = vadd.f32 %v1030, 1.0
    %v1043 = vadd.f32 %v1032, 1.0
    %v1044 = vadd.f32 %v1034, 1.0
    %v1045 = vadd.f32 %v1036, 1.0
    %v1046 = vrcp.pop %v1037
    %v1047 = vmul.f32 1.0, %v1046
    %v1048 = vrcp.pop %v1038
    %v1049 = vmul.f32 1.0, %v1048
    %v1050 = vrcp.pop %v1039
    %v1051 = vmul.f32 1.0, %v1050
    %v1052 = vrcp.pop %v1040
    %v1053 = vmul.f32 1.0, %v1052
    %v1054 = vrcp.pop %v1041
    %v1055 = vmul.f32 1.0, %v1054
    %v1056 = vrcp.pop %v1042
    %v1057 = vmul.f32 1.0, %v1056
    %v1058 = vrcp.pop %v1043
    %v1059 = vmul.f32 1.0, %v1058
    %v1060 = vrcp.pop %v1044
    %v1061 = vmul.f32 1.0, %v1060
    %v1062 = vrcp.pop %v1045
    %v1063 = vmul.f32 1.0, %v1062
    %s1064 = scalar_lea.vmem %s1, 96
    %v1065 = vld [vmem:[%s1064] sm:$0xff]
    %v1066 = vld [vmem:[%s1064 + $0x8] sm:$0xff]
    %v1067 = vld [vmem:[%s1064 + $0x10] sm:$0xf]
    %s1068 = scalar_lea.vmem %s2, 96
    %v1069 = vld [vmem:[%s1068] sm:$0xff]
    %v1070 = vld [vmem:[%s1068 + $0x8] sm:$0xff]
    %v1071 = vld [vmem:[%s1068 + $0x10] sm:$0xf]
    %1073 = vset.pattern.permute.xlu0 0
    %1074 = vperm.xlu0 %1073, %v1069
    %v1075 = vpop.permute.xlu0 %1074
    %1078 = vset.pattern.permute.xlu0 0
    %1079 = vperm.xlu0 %1078, %v1070
    %v1080 = vpop.permute.xlu0 %1079
    %1083 = vset.pattern.permute.xlu0 0
    %1084 = vperm.xlu0 %1083, %v1071
    %v1085 = vpop.permute.xlu0 %1084
    %v1088 = vsel %vm311, %v1065, 0
    %v1091 = vsel %vm311, %v1066, 0
    %v1094 = vsel %vm311, %v1067, 0
    %v1097 = vsel %vm321, %v1059, 0
    %v1100 = vsel %vm321, %v1061, 0
    %v1103 = vsel %vm321, %v1063, 0
    %1105 = vmatprep.subr.mxu0 %v1049
    %1106 = vmatpush1.msra.mxu0 %v1047
    %1107 = vmatprep.subr.mxu0 %v1055
    %1108 = vmatpush1.msra.mxu0 %v1053
    %1109 = vmatprep.subr.mxu0 %v1100
    %1110 = vmatpush1.msra.mxu0 %v1097
    %1111 = vmatprep.subr.mxu0 0.0
    %1112 = vmatpush1.msra.mxu0 0.0
    %1113 = vmatprep.subr.mxu0 0.0
    %1114 = vmatpush1.msra.mxu0 0.0
    %1115 = vmatprep.subr.mxu0 0.0
    %1116 = vmatpush1.msra.mxu0 0.0
    %1117 = vmatprep.subr.mxu0 0.0
    %1118 = vmatpush1.msra.mxu0 0.0
    %1119 = vmatprep.subr.mxu0 0.0
    %1120 = vmatpush1.msra.mxu0 0.0
    %1121 = vmatprep.subr.mxu0 0.0
    %1122 = vmatpush1.msra.mxu0 0.0
    %1123 = vmatprep.subr.mxu0 0.0
    %1124 = vmatpush1.msra.mxu0 0.0
    %1125 = vmatprep.subr.mxu0 0.0
    %1126 = vmatpush1.msra.mxu0 0.0
    %1127 = vmatprep.subr.mxu0 0.0
    %1128 = vmatpush1.msra.mxu0 0.0
    %1129 = vmatprep.subr.mxu0 0.0
    %1130 = vmatpush1.msra.mxu0 0.0
    %1131 = vmatprep.subr.mxu0 0.0
    %1132 = vmatpush1.msra.mxu0 0.0
    %1133 = vmatprep.subr.mxu0 0.0
    %1134 = vmatpush1.msra.mxu0 0.0
    %1135 = vmatprep.subr.mxu0 0.0
    %1136 = vmatpush1.msra.mxu0 0.0
    %1137 = vmatprep.subr.mxu0 0.0
    %1138 = vmatpush1.msra.mxu0 0.0
    %1139 = vmatprep.subr.mxu0 0.0
    %1140 = vmatpush1.msra.mxu0 0.0
    %1141 = vmatprep.subr.mxu0 0.0
    %1142 = vmatpush1.msra.mxu0 0.0
    %1143 = vmatprep.subr.mxu0 0.0
    %1144 = vmatpush1.msra.mxu0 0.0
    %1145 = vmatprep.subr.mxu0 0.0
    %1146 = vmatpush1.msra.mxu0 0.0
    %1147 = vmatprep.subr.mxu0 0.0
    %1148 = vmatpush1.msra.mxu0 0.0
    %1149 = vmatprep.subr.mxu0 0.0
    %1150 = vmatpush1.msra.mxu0 0.0
    %1151 = vmatprep.subr.mxu0 0.0
    %1152 = vmatpush1.msra.mxu0 0.0
    %1153 = vmatprep.subr.mxu0 0.0
    %1154 = vmatpush1.msra.mxu0 0.0
    %1155 = vmatprep.subr.mxu0 0.0
    %1156 = vmatpush1.msra.mxu0 0.0
    %1157 = vmatprep.subr.mxu0 0.0
    %1158 = vmatpush1.msra.mxu0 0.0
    %1159 = vmatprep.subr.mxu0 0.0
    %1160 = vmatpush1.msra.mxu0 0.0
    %1161 = vmatprep.subr.mxu0 0.0
    %1162 = vmatpush1.msra.mxu0 0.0
    %1163 = vmatprep.subr.mxu0 0.0
    %1164 = vmatpush1.msra.mxu0 0.0
    %1165 = vmatprep.subr.mxu0 0.0
    %1166 = vmatpush1.msra.mxu0 0.0
    %1167 = vmatprep.subr.mxu0 0.0
    %1168 = vmatpush1.msra.mxu0 0.0
    %1169 = vmatprep.mubr.f32.mxu0 0.0
    %1170 = vmatmul.mubr.f32.gmra.mrb[0].mxu0 %v1088
    %v1171 = vpop.f32.mrb[0].mxu0
    %v1172 = vadd.f32 %v1075, %v1171
    %v1173 = vpop.f32.mrb[0].mxu0
    %v1174 = vadd.f32 %v1075, %v1173
    %1175 = vmatprep.mubr.f32.mxu0 0.0
    %1176 = vmatmul.mubr.f32.gmra.mrb[0].mxu0 %v1091
    %v1177 = vpop.f32.mrb[0].mxu0
    %v1178 = vadd.f32 %v1080, %v1177
    %v1179 = vpop.f32.mrb[0].mxu0
    %v1180 = vadd.f32 %v1080, %v1179
    %1181 = vmatprep.mubr.f32.mxu0 0.0
    %1182 = vmatmul.mubr.f32.gmra.mrb[0].mxu0 %v1094
    %v1183 = vpop.f32.mrb[0].mxu0
    %v1184 = vadd.f32 %v1085, %v1183
    %v1185 = vpop.f32.mrb[0].mxu0
    %v1186 = vadd.f32 %v1085, %v1185
    %1187 = vdwg.mxu0
    %1188 = vmatprep.subr.mxu0 0.0
    %1189 = vmatpush1.msra.mxu0 %v1051
    %1190 = vmatprep.subr.mxu0 0.0
    %1191 = vmatpush1.msra.mxu0 %v1057
    %1192 = vmatprep.subr.mxu0 0.0
    %1193 = vmatpush1.msra.mxu0 %v1103
    %1194 = vmatprep.subr.mxu0 0.0
    %1195 = vmatpush1.msra.mxu0 0.0
    %1196 = vmatprep.subr.mxu0 0.0
    %1197 = vmatpush1.msra.mxu0 0.0
    %1198 = vmatprep.subr.mxu0 0.0
    %1199 = vmatpush1.msra.mxu0 0.0
    %1200 = vmatprep.subr.mxu0 0.0
    %1201 = vmatpush1.msra.mxu0 0.0
    %1202 = vmatprep.subr.mxu0 0.0
    %1203 = vmatpush1.msra.mxu0 0.0
    %1204 = vmatprep.subr.mxu0 0.0
    %1205 = vmatpush1.msra.mxu0 0.0
    %1206 = vmatprep.subr.mxu0 0.0
    %1207 = vmatpush1.msra.mxu0 0.0
    %1208 = vmatprep.subr.mxu0 0.0
    %1209 = vmatpush1.msra.mxu0 0.0
    %1210 = vmatprep.subr.mxu0 0.0
    %1211 = vmatpush1.msra.mxu0 0.0
    %1212 = vmatprep.subr.mxu0 0.0
    %1213 = vmatpush1.msra.mxu0 0.0
    %1214 = vmatprep.subr.mxu0 0.0
    %1215 = vmatpush1.msra.mxu0 0.0
    %1216 = vmatprep.subr.mxu0 0.0
    %1217 = vmatpush1.msra.mxu0 0.0
    %1218 = vmatprep.subr.mxu0 0.0
    %1219 = vmatpush1.msra.mxu0 0.0
    %1220 = vmatprep.subr.mxu0 0.0
    %1221 = vmatpush1.msra.mxu0 0.0
    %1222 = vmatprep.subr.mxu0 0.0
    %1223 = vmatpush1.msra.mxu0 0.0
    %1224 = vmatprep.subr.mxu0 0.0
    %1225 = vmatpush1.msra.mxu0 0.0
    %1226 = vmatprep.subr.mxu0 0.0
    %1227 = vmatpush1.msra.mxu0 0.0
    %1228 = vmatprep.subr.mxu0 0.0
    %1229 = vmatpush1.msra.mxu0 0.0
    %1230 = vmatprep.subr.mxu0 0.0
    %1231 = vmatpush1.msra.mxu0 0.0
    %1232 = vmatprep.subr.mxu0 0.0
    %1233 = vmatpush1.msra.mxu0 0.0
    %1234 = vmatprep.subr.mxu0 0.0
    %1235 = vmatpush1.msra.mxu0 0.0
    %1236 = vmatprep.subr.mxu0 0.0
    %1237 = vmatpush1.msra.mxu0 0.0
    %1238 = vmatprep.subr.mxu0 0.0
    %1239 = vmatpush1.msra.mxu0 0.0
    %1240 = vmatprep.subr.mxu0 0.0
    %1241 = vmatpush1.msra.mxu0 0.0
    %1242 = vmatprep.subr.mxu0 0.0
    %1243 = vmatpush1.msra.mxu0 0.0
    %1244 = vmatprep.subr.mxu0 0.0
    %1245 = vmatpush1.msra.mxu0 0.0
    %1246 = vmatprep.subr.mxu0 0.0
    %1247 = vmatpush1.msra.mxu0 0.0
    %1248 = vmatprep.subr.mxu0 0.0
    %1249 = vmatpush1.msra.mxu0 0.0
    %1250 = vmatprep.subr.mxu0 0.0
    %1251 = vmatpush1.msra.mxu0 0.0
    %1252 = vmatprep.mubr.f32.mxu0 0.0
    %1253 = vmatmul.mubr.f32.gmra.mrb[0].mxu0 %v1088
    %v1254 = vpop.f32.mrb[0].mxu0
    %v1255 = vadd.f32 %v1075, %v1254
    %v1256 = vpop.f32.mrb[0].mxu0
    %1257 = vmatprep.mubr.f32.mxu0 0.0
    %1258 = vmatmul.mubr.f32.gmra.mrb[0].mxu0 %v1091
    %v1259 = vpop.f32.mrb[0].mxu0
    %v1260 = vadd.f32 %v1080, %v1259
    %v1261 = vpop.f32.mrb[0].mxu0
    %1262 = vmatprep.mubr.f32.mxu0 0.0
    %1263 = vmatmul.mubr.f32.gmra.mrb[0].mxu0 %v1094
    %v1264 = vpop.f32.mrb[0].mxu0
    %v1265 = vadd.f32 %v1085, %v1264
    %v1266 = vpop.f32.mrb[0].mxu0
    %1267 = vdwg.mxu0
    %v1268 = vxor.u32 %v1172, 2147483648
    %v1269 = vxor.u32 %v1174, 2147483648
    %v1270 = vxor.u32 %v1255, 2147483648
    %v1271 = vxor.u32 %v1178, 2147483648
    %v1272 = vxor.u32 %v1180, 2147483648
    %v1273 = vxor.u32 %v1260, 2147483648
    %v1274 = vxor.u32 %v1184, 2147483648
    %v1275 = vxor.u32 %v1186, 2147483648
    %v1276 = vxor.u32 %v1265, 2147483648
    %v1277 = vmul.f32 %v1268, 1.442695
    %v1278 = vpow.pop %v1277
    %v1279 = vmul.f32 %v1269, 1.442695
    %v1280 = vpow.pop %v1279
    %v1281 = vmul.f32 %v1270, 1.442695
    %v1282 = vpow.pop %v1281
    %v1283 = vmul.f32 %v1271, 1.442695
    %v1284 = vpow.pop %v1283
    %v1285 = vmul.f32 %v1272, 1.442695
    %v1286 = vpow.pop %v1285
    %v1287 = vmul.f32 %v1273, 1.442695
    %v1288 = vpow.pop %v1287
    %v1289 = vmul.f32 %v1274, 1.442695
    %v1290 = vpow.pop %v1289
    %v1291 = vmul.f32 %v1275, 1.442695
    %v1292 = vpow.pop %v1291
    %v1293 = vmul.f32 %v1276, 1.442695
    %v1294 = vpow.pop %v1293
    %v1295 = vadd.f32 %v1278, 1.0
    %v1296 = vadd.f32 %v1280, 1.0
    %v1297 = vadd.f32 %v1282, 1.0
    %v1298 = vadd.f32 %v1284, 1.0
    %v1299 = vadd.f32 %v1286, 1.0
    %v1300 = vadd.f32 %v1288, 1.0
    %v1301 = vadd.f32 %v1290, 1.0
    %v1302 = vadd.f32 %v1292, 1.0
    %v1303 = vadd.f32 %v1294, 1.0
    %v1304 = vrcp.pop %v1295
    %v1305 = vmul.f32 1.0, %v1304
    %v1306 = vrcp.pop %v1296
    %v1307 = vmul.f32 1.0, %v1306
    %v1308 = vrcp.pop %v1297
    %v1309 = vmul.f32 1.0, %v1308
    %v1310 = vrcp.pop %v1298
    %v1311 = vmul.f32 1.0, %v1310
    %v1312 = vrcp.pop %v1299
    %v1313 = vmul.f32 1.0, %v1312
    %v1314 = vrcp.pop %v1300
    %v1315 = vmul.f32 1.0, %v1314
    %v1316 = vrcp.pop %v1301
    %v1317 = vmul.f32 1.0, %v1316
    %v1318 = vrcp.pop %v1302
    %v1319 = vmul.f32 1.0, %v1318
    %v1320 = vrcp.pop %v1303
    %v1321 = vmul.f32 1.0, %v1320
    %s1322 = scalar_lea.vmem %s1, 120
    %v1323 = vld [vmem:[%s1322] sm:$0xff]
    %v1324 = vld [vmem:[%s1322 + $0x8] sm:$0xff]
    %v1325 = vld [vmem:[%s1322 + $0x10] sm:$0xf]
    %s1326 = scalar_lea.vmem %s2, 120
    %v1327 = vld [vmem:[%s1326] sm:$0xff]
    %v1328 = vld [vmem:[%s1326 + $0x8] sm:$0xff]
    %v1329 = vld [vmem:[%s1326 + $0x10] sm:$0xf]
    %1331 = vset.pattern.permute.xlu0 0
    %1332 = vperm.xlu0 %1331, %v1327
    %v1333 = vpop.permute.xlu0 %1332
    %1336 = vset.pattern.permute.xlu0 0
    %1337 = vperm.xlu0 %1336, %v1328
    %v1338 = vpop.permute.xlu0 %1337
    %1341 = vset.pattern.permute.xlu0 0
    %1342 = vperm.xlu0 %1341, %v1329
    %v1343 = vpop.permute.xlu0 %1342
    %v1346 = vsel %vm311, %v1323, 0
    %v1349 = vsel %vm311, %v1324, 0
    %v1352 = vsel %vm311, %v1325, 0
    %v1355 = vsel %vm321, %v1317, 0
    %v1358 = vsel %vm321, %v1319, 0
    %v1361 = vsel %vm321, %v1321, 0
    %1363 = vmatprep.subr.mxu0 %v1307
    %1364 = vmatpush1.msra.mxu0 %v1305
    %1365 = vmatprep.subr.mxu0 %v1313
    %1366 = vmatpush1.msra.mxu0 %v1311
    %1367 = vmatprep.subr.mxu0 %v1358
    %1368 = vmatpush1.msra.mxu0 %v1355
    %1369 = vmatprep.subr.mxu0 0.0
    %1370 = vmatpush1.msra.mxu0 0.0
    %1371 = vmatprep.subr.mxu0 0.0
    %1372 = vmatpush1.msra.mxu0 0.0
    %1373 = vmatprep.subr.mxu0 0.0
    %1374 = vmatpush1.msra.mxu0 0.0
    %1375 = vmatprep.subr.mxu0 0.0
    %1376 = vmatpush1.msra.mxu0 0.0
    %1377 = vmatprep.subr.mxu0 0.0
    %1378 = vmatpush1.msra.mxu0 0.0
    %1379 = vmatprep.subr.mxu0 0.0
    %1380 = vmatpush1.msra.mxu0 0.0
    %1381 = vmatprep.subr.mxu0 0.0
    %1382 = vmatpush1.msra.mxu0 0.0
    %1383 = vmatprep.subr.mxu0 0.0
    %1384 = vmatpush1.msra.mxu0 0.0
    %1385 = vmatprep.subr.mxu0 0.0
    %1386 = vmatpush1.msra.mxu0 0.0
    %1387 = vmatprep.subr.mxu0 0.0
    %1388 = vmatpush1.msra.mxu0 0.0
    %1389 = vmatprep.subr.mxu0 0.0
    %1390 = vmatpush1.msra.mxu0 0.0
    %1391 = vmatprep.subr.mxu0 0.0
    %1392 = vmatpush1.msra.mxu0 0.0
    %1393 = vmatprep.subr.mxu0 0.0
    %1394 = vmatpush1.msra.mxu0 0.0
    %1395 = vmatprep.subr.mxu0 0.0
    %1396 = vmatpush1.msra.mxu0 0.0
    %1397 = vmatprep.subr.mxu0 0.0
    %1398 = vmatpush1.msra.mxu0 0.0
    %1399 = vmatprep.subr.mxu0 0.0
    %1400 = vmatpush1.msra.mxu0 0.0
    %1401 = vmatprep.subr.mxu0 0.0
    %1402 = vmatpush1.msra.mxu0 0.0
    %1403 = vmatprep.subr.mxu0 0.0
    %1404 = vmatpush1.msra.mxu0 0.0
    %1405 = vmatprep.subr.mxu0 0.0
    %1406 = vmatpush1.msra.mxu0 0.0
    %1407 = vmatprep.subr.mxu0 0.0
    %1408 = vmatpush1.msra.mxu0 0.0
    %1409 = vmatprep.subr.mxu0 0.0
    %1410 = vmatpush1.msra.mxu0 0.0
    %1411 = vmatprep.subr.mxu0 0.0
    %1412 = vmatpush1.msra.mxu0 0.0
    %1413 = vmatprep.subr.mxu0 0.0
    %1414 = vmatpush1.msra.mxu0 0.0
    %1415 = vmatprep.subr.mxu0 0.0
    %1416 = vmatpush1.msra.mxu0 0.0
    %1417 = vmatprep.subr.mxu0 0.0
    %1418 = vmatpush1.msra.mxu0 0.0
    %1419 = vmatprep.subr.mxu0 0.0
    %1420 = vmatpush1.msra.mxu0 0.0
    %1421 = vmatprep.subr.mxu0 0.0
    %1422 = vmatpush1.msra.mxu0 0.0
    %1423 = vmatprep.subr.mxu0 0.0
    %1424 = vmatpush1.msra.mxu0 0.0
    %1425 = vmatprep.subr.mxu0 0.0
    %1426 = vmatpush1.msra.mxu0 0.0
    %1427 = vmatprep.mubr.f32.mxu0 0.0
    %1428 = vmatmul.mubr.f32.gmra.mrb[0].mxu0 %v1346
    %v1429 = vpop.f32.mrb[0].mxu0
    %v1430 = vadd.f32 %v1333, %v1429
    %v1431 = vpop.f32.mrb[0].mxu0
    %v1432 = vadd.f32 %v1333, %v1431
    %1433 = vmatprep.mubr.f32.mxu0 0.0
    %1434 = vmatmul.mubr.f32.gmra.mrb[0].mxu0 %v1349
    %v1435 = vpop.f32.mrb[0].mxu0
    %v1436 = vadd.f32 %v1338, %v1435
    %v1437 = vpop.f32.mrb[0].mxu0
    %v1438 = vadd.f32 %v1338, %v1437
    %1439 = vmatprep.mubr.f32.mxu0 0.0
    %1440 = vmatmul.mubr.f32.gmra.mrb[0].mxu0 %v1352
    %v1441 = vpop.f32.mrb[0].mxu0
    %v1442 = vadd.f32 %v1343, %v1441
    %v1443 = vpop.f32.mrb[0].mxu0
    %v1444 = vadd.f32 %v1343, %v1443
    %1445 = vdwg.mxu0
    %1446 = vmatprep.subr.mxu0 0.0
    %1447 = vmatpush1.msra.mxu0 %v1309
    %1448 = vmatprep.subr.mxu0 0.0
    %1449 = vmatpush1.msra.mxu0 %v1315
    %1450 = vmatprep.subr.mxu0 0.0
    %1451 = vmatpush1.msra.mxu0 %v1361
    %1452 = vmatprep.subr.mxu0 0.0
    %1453 = vmatpush1.msra.mxu0 0.0
    %1454 = vmatprep.subr.mxu0 0.0
    %1455 = vmatpush1.msra.mxu0 0.0
    %1456 = vmatprep.subr.mxu0 0.0
    %1457 = vmatpush1.msra.mxu0 0.0
    %1458 = vmatprep.subr.mxu0 0.0
    %1459 = vmatpush1.msra.mxu0 0.0
    %1460 = vmatprep.subr.mxu0 0.0
    %1461 = vmatpush1.msra.mxu0 0.0
    %1462 = vmatprep.subr.mxu0 0.0
    %1463 = vmatpush1.msra.mxu0 0.0
    %1464 = vmatprep.subr.mxu0 0.0
    %1465 = vmatpush1.msra.mxu0 0.0
    %1466 = vmatprep.subr.mxu0 0.0
    %1467 = vmatpush1.msra.mxu0 0.0
    %1468 = vmatprep.subr.mxu0 0.0
    %1469 = vmatpush1.msra.mxu0 0.0
    %1470 = vmatprep.subr.mxu0 0.0
    %1471 = vmatpush1.msra.mxu0 0.0
    %1472 = vmatprep.subr.mxu0 0.0
    %1473 = vmatpush1.msra.mxu0 0.0
    %1474 = vmatprep.subr.mxu0 0.0
    %1475 = vmatpush1.msra.mxu0 0.0
    %1476 = vmatprep.subr.mxu0 0.0
    %1477 = vmatpush1.msra.mxu0 0.0
    %1478 = vmatprep.subr.mxu0 0.0
    %1479 = vmatpush1.msra.mxu0 0.0
    %1480 = vmatprep.subr.mxu0 0.0
    %1481 = vmatpush1.msra.mxu0 0.0
    %1482 = vmatprep.subr.mxu0 0.0
    %1483 = vmatpush1.msra.mxu0 0.0
    %1484 = vmatprep.subr.mxu0 0.0
    %1485 = vmatpush1.msra.mxu0 0.0
    %1486 = vmatprep.subr.mxu0 0.0
    %1487 = vmatpush1.msra.mxu0 0.0
    %1488 = vmatprep.subr.mxu0 0.0
    %1489 = vmatpush1.msra.mxu0 0.0
    %1490 = vmatprep.subr.mxu0 0.0
    %1491 = vmatpush1.msra.mxu0 0.0
    %1492 = vmatprep.subr.mxu0 0.0
    %1493 = vmatpush1.msra.mxu0 0.0
    %1494 = vmatprep.subr.mxu0 0.0
    %1495 = vmatpush1.msra.mxu0 0.0
    %1496 = vmatprep.subr.mxu0 0.0
    %1497 = vmatpush1.msra.mxu0 0.0
    %1498 = vmatprep.subr.mxu0 0.0
    %1499 = vmatpush1.msra.mxu0 0.0
    %1500 = vmatprep.subr.mxu0 0.0
    %1501 = vmatpush1.msra.mxu0 0.0
    %1502 = vmatprep.subr.mxu0 0.0
    %1503 = vmatpush1.msra.mxu0 0.0
    %1504 = vmatprep.subr.mxu0 0.0
    %1505 = vmatpush1.msra.mxu0 0.0
    %1506 = vmatprep.subr.mxu0 0.0
    %1507 = vmatpush1.msra.mxu0 0.0
    %1508 = vmatprep.subr.mxu0 0.0
    %1509 = vmatpush1.msra.mxu0 0.0
    %1510 = vmatprep.mubr.f32.mxu0 0.0
    %1511 = vmatmul.mubr.f32.gmra.mrb[0].mxu0 %v1346
    %v1512 = vpop.f32.mrb[0].mxu0
    %v1513 = vadd.f32 %v1333, %v1512
    %v1514 = vpop.f32.mrb[0].mxu0
    %1515 = vmatprep.mubr.f32.mxu0 0.0
    %1516 = vmatmul.mubr.f32.gmra.mrb[0].mxu0 %v1349
    %v1517 = vpop.f32.mrb[0].mxu0
    %v1518 = vadd.f32 %v1338, %v1517
    %v1519 = vpop.f32.mrb[0].mxu0
    %1520 = vmatprep.mubr.f32.mxu0 0.0
    %1521 = vmatmul.mubr.f32.gmra.mrb[0].mxu0 %v1352
    %v1522 = vpop.f32.mrb[0].mxu0
    %v1523 = vadd.f32 %v1343, %v1522
    %v1524 = vpop.f32.mrb[0].mxu0
    %1525 = vdwg.mxu0
    %v1526 = vxor.u32 %v1430, 2147483648
    %v1527 = vxor.u32 %v1432, 2147483648
    %v1528 = vxor.u32 %v1513, 2147483648
    %v1529 = vxor.u32 %v1436, 2147483648
    %v1530 = vxor.u32 %v1438, 2147483648
    %v1531 = vxor.u32 %v1518, 2147483648
    %v1532 = vxor.u32 %v1442, 2147483648
    %v1533 = vxor.u32 %v1444, 2147483648
    %v1534 = vxor.u32 %v1523, 2147483648
    %v1535 = vmul.f32 %v1526, 1.442695
    %v1536 = vpow.pop %v1535
    %v1537 = vmul.f32 %v1527, 1.442695
    %v1538 = vpow.pop %v1537
    %v1539 = vmul.f32 %v1528, 1.442695
    %v1540 = vpow.pop %v1539
    %v1541 = vmul.f32 %v1529, 1.442695
    %v1542 = vpow.pop %v1541
    %v1543 = vmul.f32 %v1530, 1.442695
    %v1544 = vpow.pop %v1543
    %v1545 = vmul.f32 %v1531, 1.442695
    %v1546 = vpow.pop %v1545
    %v1547 = vmul.f32 %v1532, 1.442695
    %v1548 = vpow.pop %v1547
    %v1549 = vmul.f32 %v1533, 1.442695
    %v1550 = vpow.pop %v1549
    %v1551 = vmul.f32 %v1534, 1.442695
    %v1552 = vpow.pop %v1551
    %v1553 = vadd.f32 %v1536, 1.0
    %v1554 = vadd.f32 %v1538, 1.0
    %v1555 = vadd.f32 %v1540, 1.0
    %v1556 = vadd.f32 %v1542, 1.0
    %v1557 = vadd.f32 %v1544, 1.0
    %v1558 = vadd.f32 %v1546, 1.0
    %v1559 = vadd.f32 %v1548, 1.0
    %v1560 = vadd.f32 %v1550, 1.0
    %v1561 = vadd.f32 %v1552, 1.0
    %v1562 = vrcp.pop %v1553
    %v1563 = vmul.f32 1.0, %v1562
    %v1564 = vrcp.pop %v1554
    %v1565 = vmul.f32 1.0, %v1564
    %v1566 = vrcp.pop %v1555
    %v1567 = vmul.f32 1.0, %v1566
    %v1568 = vrcp.pop %v1556
    %v1569 = vmul.f32 1.0, %v1568
    %v1570 = vrcp.pop %v1557
    %v1571 = vmul.f32 1.0, %v1570
    %v1572 = vrcp.pop %v1558
    %v1573 = vmul.f32 1.0, %v1572
    %v1574 = vrcp.pop %v1559
    %v1575 = vmul.f32 1.0, %v1574
    %v1576 = vrcp.pop %v1560
    %v1577 = vmul.f32 1.0, %v1576
    %v1578 = vrcp.pop %v1561
    %v1579 = vmul.f32 1.0, %v1578
    %s1580 = scalar_lea.vmem %s1, 144
    %v1581 = vld [vmem:[%s1580] sm:$0xff]
    %v1582 = vld [vmem:[%s1580 + $0x8] sm:$0xff]
    %v1583 = vld [vmem:[%s1580 + $0x10] sm:$0xf]
    %s1584 = scalar_lea.vmem %s2, 144
    %v1585 = vld [vmem:[%s1584] sm:$0xff]
    %v1586 = vld [vmem:[%s1584 + $0x8] sm:$0xff]
    %v1587 = vld [vmem:[%s1584 + $0x10] sm:$0xf]
    %1589 = vset.pattern.permute.xlu0 0
    %1590 = vperm.xlu0 %1589, %v1585
    %v1591 = vpop.permute.xlu0 %1590
    %1594 = vset.pattern.permute.xlu0 0
    %1595 = vperm.xlu0 %1594, %v1586
    %v1596 = vpop.permute.xlu0 %1595
    %1599 = vset.pattern.permute.xlu0 0
    %1600 = vperm.xlu0 %1599, %v1587
    %v1601 = vpop.permute.xlu0 %1600
    %v1604 = vsel %vm311, %v1581, 0
    %v1607 = vsel %vm311, %v1582, 0
    %v1610 = vsel %vm311, %v1583, 0
    %v1613 = vsel %vm321, %v1575, 0
    %v1616 = vsel %vm321, %v1577, 0
    %v1619 = vsel %vm321, %v1579, 0
    %1621 = vmatprep.subr.mxu0 %v1565
    %1622 = vmatpush1.msra.mxu0 %v1563
    %1623 = vmatprep.subr.mxu0 %v1571
    %1624 = vmatpush1.msra.mxu0 %v1569
    %1625 = vmatprep.subr.mxu0 %v1616
    %1626 = vmatpush1.msra.mxu0 %v1613
    %1627 = vmatprep.subr.mxu0 0.0
    %1628 = vmatpush1.msra.mxu0 0.0
    %1629 = vmatprep.subr.mxu0 0.0
    %1630 = vmatpush1.msra.mxu0 0.0
    %1631 = vmatprep.subr.mxu0 0.0
    %1632 = vmatpush1.msra.mxu0 0.0
    %1633 = vmatprep.subr.mxu0 0.0
    %1634 = vmatpush1.msra.mxu0 0.0
    %1635 = vmatprep.subr.mxu0 0.0
    %1636 = vmatpush1.msra.mxu0 0.0
    %1637 = vmatprep.subr.mxu0 0.0
    %1638 = vmatpush1.msra.mxu0 0.0
    %1639 = vmatprep.subr.mxu0 0.0
    %1640 = vmatpush1.msra.mxu0 0.0
    %1641 = vmatprep.subr.mxu0 0.0
    %1642 = vmatpush1.msra.mxu0 0.0
    %1643 = vmatprep.subr.mxu0 0.0
    %1644 = vmatpush1.msra.mxu0 0.0
    %1645 = vmatprep.subr.mxu0 0.0
    %1646 = vmatpush1.msra.mxu0 0.0
    %1647 = vmatprep.subr.mxu0 0.0
    %1648 = vmatpush1.msra.mxu0 0.0
    %1649 = vmatprep.subr.mxu0 0.0
    %1650 = vmatpush1.msra.mxu0 0.0
    %1651 = vmatprep.subr.mxu0 0.0
    %1652 = vmatpush1.msra.mxu0 0.0
    %1653 = vmatprep.subr.mxu0 0.0
    %1654 = vmatpush1.msra.mxu0 0.0
    %1655 = vmatprep.subr.mxu0 0.0
    %1656 = vmatpush1.msra.mxu0 0.0
    %1657 = vmatprep.subr.mxu0 0.0
    %1658 = vmatpush1.msra.mxu0 0.0
    %1659 = vmatprep.subr.mxu0 0.0
    %1660 = vmatpush1.msra.mxu0 0.0
    %1661 = vmatprep.subr.mxu0 0.0
    %1662 = vmatpush1.msra.mxu0 0.0
    %1663 = vmatprep.subr.mxu0 0.0
    %1664 = vmatpush1.msra.mxu0 0.0
    %1665 = vmatprep.subr.mxu0 0.0
    %1666 = vmatpush1.msra.mxu0 0.0
    %1667 = vmatprep.subr.mxu0 0.0
    %1668 = vmatpush1.msra.mxu0 0.0
    %1669 = vmatprep.subr.mxu0 0.0
    %1670 = vmatpush1.msra.mxu0 0.0
    %1671 = vmatprep.subr.mxu0 0.0
    %1672 = vmatpush1.msra.mxu0 0.0
    %1673 = vmatprep.subr.mxu0 0.0
    %1674 = vmatpush1.msra.mxu0 0.0
    %1675 = vmatprep.subr.mxu0 0.0
    %1676 = vmatpush1.msra.mxu0 0.0
    %1677 = vmatprep.subr.mxu0 0.0
    %1678 = vmatpush1.msra.mxu0 0.0
    %1679 = vmatprep.subr.mxu0 0.0
    %1680 = vmatpush1.msra.mxu0 0.0
    %1681 = vmatprep.subr.mxu0 0.0
    %1682 = vmatpush1.msra.mxu0 0.0
    %1683 = vmatprep.subr.mxu0 0.0
    %1684 = vmatpush1.msra.mxu0 0.0
    %1685 = vmatprep.mubr.f32.mxu0 0.0
    %1686 = vmatmul.mubr.f32.gmra.mrb[0].mxu0 %v1604
    %v1687 = vpop.f32.mrb[0].mxu0
    %v1688 = vadd.f32 %v1591, %v1687
    %v1689 = vpop.f32.mrb[0].mxu0
    %v1690 = vadd.f32 %v1591, %v1689
    %1691 = vmatprep.mubr.f32.mxu0 0.0
    %1692 = vmatmul.mubr.f32.gmra.mrb[0].mxu0 %v1607
    %v1693 = vpop.f32.mrb[0].mxu0
    %v1694 = vadd.f32 %v1596, %v1693
    %v1695 = vpop.f32.mrb[0].mxu0
    %v1696 = vadd.f32 %v1596, %v1695
    %1697 = vmatprep.mubr.f32.mxu0 0.0
    %1698 = vmatmul.mubr.f32.gmra.mrb[0].mxu0 %v1610
    %v1699 = vpop.f32.mrb[0].mxu0
    %v1700 = vadd.f32 %v1601, %v1699
    %v1701 = vpop.f32.mrb[0].mxu0
    %v1702 = vadd.f32 %v1601, %v1701
    %1703 = vdwg.mxu0
    %1704 = vmatprep.subr.mxu0 0.0
    %1705 = vmatpush1.msra.mxu0 %v1567
    %1706 = vmatprep.subr.mxu0 0.0
    %1707 = vmatpush1.msra.mxu0 %v1573
    %1708 = vmatprep.subr.mxu0 0.0
    %1709 = vmatpush1.msra.mxu0 %v1619
    %1710 = vmatprep.subr.mxu0 0.0
    %1711 = vmatpush1.msra.mxu0 0.0
    %1712 = vmatprep.subr.mxu0 0.0
    %1713 = vmatpush1.msra.mxu0 0.0
    %1714 = vmatprep.subr.mxu0 0.0
    %1715 = vmatpush1.msra.mxu0 0.0
    %1716 = vmatprep.subr.mxu0 0.0
    %1717 = vmatpush1.msra.mxu0 0.0
    %1718 = vmatprep.subr.mxu0 0.0
    %1719 = vmatpush1.msra.mxu0 0.0
    %1720 = vmatprep.subr.mxu0 0.0
    %1721 = vmatpush1.msra.mxu0 0.0
    %1722 = vmatprep.subr.mxu0 0.0
    %1723 = vmatpush1.msra.mxu0 0.0
    %1724 = vmatprep.subr.mxu0 0.0
    %1725 = vmatpush1.msra.mxu0 0.0
    %1726 = vmatprep.subr.mxu0 0.0
    %1727 = vmatpush1.msra.mxu0 0.0
    %1728 = vmatprep.subr.mxu0 0.0
    %1729 = vmatpush1.msra.mxu0 0.0
    %1730 = vmatprep.subr.mxu0 0.0
    %1731 = vmatpush1.msra.mxu0 0.0
    %1732 = vmatprep.subr.mxu0 0.0
    %1733 = vmatpush1.msra.mxu0 0.0
    %1734 = vmatprep.subr.mxu0 0.0
    %1735 = vmatpush1.msra.mxu0 0.0
    %1736 = vmatprep.subr.mxu0 0.0
    %1737 = vmatpush1.msra.mxu0 0.0
    %1738 = vmatprep.subr.mxu0 0.0
    %1739 = vmatpush1.msra.mxu0 0.0
    %1740 = vmatprep.subr.mxu0 0.0
    %1741 = vmatpush1.msra.mxu0 0.0
    %1742 = vmatprep.subr.mxu0 0.0
    %1743 = vmatpush1.msra.mxu0 0.0
    %1744 = vmatprep.subr.mxu0 0.0
    %1745 = vmatpush1.msra.mxu0 0.0
    %1746 = vmatprep.subr.mxu0 0.0
    %1747 = vmatpush1.msra.mxu0 0.0
    %1748 = vmatprep.subr.mxu0 0.0
    %1749 = vmatpush1.msra.mxu0 0.0
    %1750 = vmatprep.subr.mxu0 0.0
    %1751 = vmatpush1.msra.mxu0 0.0
    %1752 = vmatprep.subr.mxu0 0.0
    %1753 = vmatpush1.msra.mxu0 0.0
    %1754 = vmatprep.subr.mxu0 0.0
    %1755 = vmatpush1.msra.mxu0 0.0
    %1756 = vmatprep.subr.mxu0 0.0
    %1757 = vmatpush1.msra.mxu0 0.0
    %1758 = vmatprep.subr.mxu0 0.0
    %1759 = vmatpush1.msra.mxu0 0.0
    %1760 = vmatprep.subr.mxu0 0.0
    %1761 = vmatpush1.msra.mxu0 0.0
    %1762 = vmatprep.subr.mxu0 0.0
    %1763 = vmatpush1.msra.mxu0 0.0
    %1764 = vmatprep.subr.mxu0 0.0
    %1765 = vmatpush1.msra.mxu0 0.0
    %1766 = vmatprep.subr.mxu0 0.0
    %1767 = vmatpush1.msra.mxu0 0.0
    %1768 = vmatprep.mubr.f32.mxu0 0.0
    %1769 = vmatmul.mubr.f32.gmra.mrb[0].mxu0 %v1604
    %v1770 = vpop.f32.mrb[0].mxu0
    %v1771 = vadd.f32 %v1591, %v1770
    %v1772 = vpop.f32.mrb[0].mxu0
    %1773 = vmatprep.mubr.f32.mxu0 0.0
    %1774 = vmatmul.mubr.f32.gmra.mrb[0].mxu0 %v1607
    %v1775 = vpop.f32.mrb[0].mxu0
    %v1776 = vadd.f32 %v1596, %v1775
    %v1777 = vpop.f32.mrb[0].mxu0
    %1778 = vmatprep.mubr.f32.mxu0 0.0
    %1779 = vmatmul.mubr.f32.gmra.mrb[0].mxu0 %v1610
    %v1780 = vpop.f32.mrb[0].mxu0
    %v1781 = vadd.f32 %v1601, %v1780
    %v1782 = vpop.f32.mrb[0].mxu0
    %1783 = vdwg.mxu0
    %v1784 = vxor.u32 %v1688, 2147483648
    %v1785 = vxor.u32 %v1690, 2147483648
    %v1786 = vxor.u32 %v1771, 2147483648
    %v1787 = vxor.u32 %v1694, 2147483648
    %v1788 = vxor.u32 %v1696, 2147483648
    %v1789 = vxor.u32 %v1776, 2147483648
    %v1790 = vxor.u32 %v1700, 2147483648
    %v1791 = vxor.u32 %v1702, 2147483648
    %v1792 = vxor.u32 %v1781, 2147483648
    %v1793 = vmul.f32 %v1784, 1.442695
    %v1794 = vpow.pop %v1793
    %v1795 = vmul.f32 %v1785, 1.442695
    %v1796 = vpow.pop %v1795
    %v1797 = vmul.f32 %v1786, 1.442695
    %v1798 = vpow.pop %v1797
    %v1799 = vmul.f32 %v1787, 1.442695
    %v1800 = vpow.pop %v1799
    %v1801 = vmul.f32 %v1788, 1.442695
    %v1802 = vpow.pop %v1801
    %v1803 = vmul.f32 %v1789, 1.442695
    %v1804 = vpow.pop %v1803
    %v1805 = vmul.f32 %v1790, 1.442695
    %v1806 = vpow.pop %v1805
    %v1807 = vmul.f32 %v1791, 1.442695
    %v1808 = vpow.pop %v1807
    %v1809 = vmul.f32 %v1792, 1.442695
    %v1810 = vpow.pop %v1809
    %v1811 = vadd.f32 %v1794, 1.0
    %v1812 = vadd.f32 %v1796, 1.0
    %v1813 = vadd.f32 %v1798, 1.0
    %v1814 = vadd.f32 %v1800, 1.0
    %v1815 = vadd.f32 %v1802, 1.0
    %v1816 = vadd.f32 %v1804, 1.0
    %v1817 = vadd.f32 %v1806, 1.0
    %v1818 = vadd.f32 %v1808, 1.0
    %v1819 = vadd.f32 %v1810, 1.0
    %v1820 = vrcp.pop %v1811
    %v1821 = vmul.f32 1.0, %v1820
    %v1822 = vrcp.pop %v1812
    %v1823 = vmul.f32 1.0, %v1822
    %v1824 = vrcp.pop %v1813
    %v1825 = vmul.f32 1.0, %v1824
    %v1826 = vrcp.pop %v1814
    %v1827 = vmul.f32 1.0, %v1826
    %v1828 = vrcp.pop %v1815
    %v1829 = vmul.f32 1.0, %v1828
    %v1830 = vrcp.pop %v1816
    %v1831 = vmul.f32 1.0, %v1830
    %v1832 = vrcp.pop %v1817
    %v1833 = vmul.f32 1.0, %v1832
    %v1834 = vrcp.pop %v1818
    %v1835 = vmul.f32 1.0, %v1834
    %v1836 = vrcp.pop %v1819
    %v1837 = vmul.f32 1.0, %v1836
    %s1838 = scalar_lea.vmem %s1, 168
    %v1839 = vld [vmem:[%s1838] sm:$0xff]
    %v1840 = vld [vmem:[%s1838 + $0x8] sm:$0xff]
    %v1841 = vld [vmem:[%s1838 + $0x10] sm:$0xf]
    %s1842 = scalar_lea.vmem %s2, 168
    %v1843 = vld [vmem:[%s1842] sm:$0xff]
    %v1844 = vld [vmem:[%s1842 + $0x8] sm:$0xff]
    %v1845 = vld [vmem:[%s1842 + $0x10] sm:$0xf]
    %1847 = vset.pattern.permute.xlu0 0
    %1848 = vperm.xlu0 %1847, %v1843
    %v1849 = vpop.permute.xlu0 %1848
    %1852 = vset.pattern.permute.xlu0 0
    %1853 = vperm.xlu0 %1852, %v1844
    %v1854 = vpop.permute.xlu0 %1853
    %1857 = vset.pattern.permute.xlu0 0
    %1858 = vperm.xlu0 %1857, %v1845
    %v1859 = vpop.permute.xlu0 %1858
    %v1862 = vsel %vm311, %v1839, 0
    %v1865 = vsel %vm311, %v1840, 0
    %v1868 = vsel %vm311, %v1841, 0
    %v1871 = vsel %vm321, %v1833, 0
    %v1874 = vsel %vm321, %v1835, 0
    %v1877 = vsel %vm321, %v1837, 0
    %1879 = vmatprep.subr.mxu0 %v1823
    %1880 = vmatpush1.msra.mxu0 %v1821
    %1881 = vmatprep.subr.mxu0 %v1829
    %1882 = vmatpush1.msra.mxu0 %v1827
    %1883 = vmatprep.subr.mxu0 %v1874
    %1884 = vmatpush1.msra.mxu0 %v1871
    %1885 = vmatprep.subr.mxu0 0.0
    %1886 = vmatpush1.msra.mxu0 0.0
    %1887 = vmatprep.subr.mxu0 0.0
    %1888 = vmatpush1.msra.mxu0 0.0
    %1889 = vmatprep.subr.mxu0 0.0
    %1890 = vmatpush1.msra.mxu0 0.0
    %1891 = vmatprep.subr.mxu0 0.0
    %1892 = vmatpush1.msra.mxu0 0.0
    %1893 = vmatprep.subr.mxu0 0.0
    %1894 = vmatpush1.msra.mxu0 0.0
    %1895 = vmatprep.subr.mxu0 0.0
    %1896 = vmatpush1.msra.mxu0 0.0
    %1897 = vmatprep.subr.mxu0 0.0
    %1898 = vmatpush1.msra.mxu0 0.0
    %1899 = vmatprep.subr.mxu0 0.0
    %1900 = vmatpush1.msra.mxu0 0.0
    %1901 = vmatprep.subr.mxu0 0.0
    %1902 = vmatpush1.msra.mxu0 0.0
    %1903 = vmatprep.subr.mxu0 0.0
    %1904 = vmatpush1.msra.mxu0 0.0
    %1905 = vmatprep.subr.mxu0 0.0
    %1906 = vmatpush1.msra.mxu0 0.0
    %1907 = vmatprep.subr.mxu0 0.0
    %1908 = vmatpush1.msra.mxu0 0.0
    %1909 = vmatprep.subr.mxu0 0.0
    %1910 = vmatpush1.msra.mxu0 0.0
    %1911 = vmatprep.subr.mxu0 0.0
    %1912 = vmatpush1.msra.mxu0 0.0
    %1913 = vmatprep.subr.mxu0 0.0
    %1914 = vmatpush1.msra.mxu0 0.0
    %1915 = vmatprep.subr.mxu0 0.0
    %1916 = vmatpush1.msra.mxu0 0.0
    %1917 = vmatprep.subr.mxu0 0.0
    %1918 = vmatpush1.msra.mxu0 0.0
    %1919 = vmatprep.subr.mxu0 0.0
    %1920 = vmatpush1.msra.mxu0 0.0
    %1921 = vmatprep.subr.mxu0 0.0
    %1922 = vmatpush1.msra.mxu0 0.0
    %1923 = vmatprep.subr.mxu0 0.0
    %1924 = vmatpush1.msra.mxu0 0.0
    %1925 = vmatprep.subr.mxu0 0.0
    %1926 = vmatpush1.msra.mxu0 0.0
    %1927 = vmatprep.subr.mxu0 0.0
    %1928 = vmatpush1.msra.mxu0 0.0
    %1929 = vmatprep.subr.mxu0 0.0
    %1930 = vmatpush1.msra.mxu0 0.0
    %1931 = vmatprep.subr.mxu0 0.0
    %1932 = vmatpush1.msra.mxu0 0.0
    %1933 = vmatprep.subr.mxu0 0.0
    %1934 = vmatpush1.msra.mxu0 0.0
    %1935 = vmatprep.subr.mxu0 0.0
    %1936 = vmatpush1.msra.mxu0 0.0
    %1937 = vmatprep.subr.mxu0 0.0
    %1938 = vmatpush1.msra.mxu0 0.0
    %1939 = vmatprep.subr.mxu0 0.0
    %1940 = vmatpush1.msra.mxu0 0.0
    %1941 = vmatprep.subr.mxu0 0.0
    %1942 = vmatpush1.msra.mxu0 0.0
    %1943 = vmatprep.mubr.f32.mxu0 0.0
    %1944 = vmatmul.mubr.f32.gmra.mrb[0].mxu0 %v1862
    %v1945 = vpop.f32.mrb[0].mxu0
    %v1946 = vadd.f32 %v1849, %v1945
    %v1947 = vpop.f32.mrb[0].mxu0
    %v1948 = vadd.f32 %v1849, %v1947
    %1949 = vmatprep.mubr.f32.mxu0 0.0
    %1950 = vmatmul.mubr.f32.gmra.mrb[0].mxu0 %v1865
    %v1951 = vpop.f32.mrb[0].mxu0
    %v1952 = vadd.f32 %v1854, %v1951
    %v1953 = vpop.f32.mrb[0].mxu0
    %v1954 = vadd.f32 %v1854, %v1953
    %1955 = vmatprep.mubr.f32.mxu0 0.0
    %1956 = vmatmul.mubr.f32.gmra.mrb[0].mxu0 %v1868
    %v1957 = vpop.f32.mrb[0].mxu0
    %v1958 = vadd.f32 %v1859, %v1957
    %v1959 = vpop.f32.mrb[0].mxu0
    %v1960 = vadd.f32 %v1859, %v1959
    %1961 = vdwg.mxu0
    %1962 = vmatprep.subr.mxu0 0.0
    %1963 = vmatpush1.msra.mxu0 %v1825
    %1964 = vmatprep.subr.mxu0 0.0
    %1965 = vmatpush1.msra.mxu0 %v1831
    %1966 = vmatprep.subr.mxu0 0.0
    %1967 = vmatpush1.msra.mxu0 %v1877
    %1968 = vmatprep.subr.mxu0 0.0
    %1969 = vmatpush1.msra.mxu0 0.0
    %1970 = vmatprep.subr.mxu0 0.0
    %1971 = vmatpush1.msra.mxu0 0.0
    %1972 = vmatprep.subr.mxu0 0.0
    %1973 = vmatpush1.msra.mxu0 0.0
    %1974 = vmatprep.subr.mxu0 0.0
    %1975 = vmatpush1.msra.mxu0 0.0
    %1976 = vmatprep.subr.mxu0 0.0
    %1977 = vmatpush1.msra.mxu0 0.0
    %1978 = vmatprep.subr.mxu0 0.0
    %1979 = vmatpush1.msra.mxu0 0.0
    %1980 = vmatprep.subr.mxu0 0.0
    %1981 = vmatpush1.msra.mxu0 0.0
    %1982 = vmatprep.subr.mxu0 0.0
    %1983 = vmatpush1.msra.mxu0 0.0
    %1984 = vmatprep.subr.mxu0 0.0
    %1985 = vmatpush1.msra.mxu0 0.0
    %1986 = vmatprep.subr.mxu0 0.0
    %1987 = vmatpush1.msra.mxu0 0.0
    %1988 = vmatprep.subr.mxu0 0.0
    %1989 = vmatpush1.msra.mxu0 0.0
    %1990 = vmatprep.subr.mxu0 0.0
    %1991 = vmatpush1.msra.mxu0 0.0
    %1992 = vmatprep.subr.mxu0 0.0
    %1993 = vmatpush1.msra.mxu0 0.0
    %1994 = vmatprep.subr.mxu0 0.0
    %1995 = vmatpush1.msra.mxu0 0.0
    %1996 = vmatprep.subr.mxu0 0.0
    %1997 = vmatpush1.msra.mxu0 0.0
    %1998 = vmatprep.subr.mxu0 0.0
    %1999 = vmatpush1.msra.mxu0 0.0
    %2000 = vmatprep.subr.mxu0 0.0
    %2001 = vmatpush1.msra.mxu0 0.0
    %2002 = vmatprep.subr.mxu0 0.0
    %2003 = vmatpush1.msra.mxu0 0.0
    %2004 = vmatprep.subr.mxu0 0.0
    %2005 = vmatpush1.msra.mxu0 0.0
    %2006 = vmatprep.subr.mxu0 0.0
    %2007 = vmatpush1.msra.mxu0 0.0
    %2008 = vmatprep.subr.mxu0 0.0
    %2009 = vmatpush1.msra.mxu0 0.0
    %2010 = vmatprep.subr.mxu0 0.0
    %2011 = vmatpush1.msra.mxu0 0.0
    %2012 = vmatprep.subr.mxu0 0.0
    %2013 = vmatpush1.msra.mxu0 0.0
    %2014 = vmatprep.subr.mxu0 0.0
    %2015 = vmatpush1.msra.mxu0 0.0
    %2016 = vmatprep.subr.mxu0 0.0
    %2017 = vmatpush1.msra.mxu0 0.0
    %2018 = vmatprep.subr.mxu0 0.0
    %2019 = vmatpush1.msra.mxu0 0.0
    %2020 = vmatprep.subr.mxu0 0.0
    %2021 = vmatpush1.msra.mxu0 0.0
    %2022 = vmatprep.subr.mxu0 0.0
    %2023 = vmatpush1.msra.mxu0 0.0
    %2024 = vmatprep.subr.mxu0 0.0
    %2025 = vmatpush1.msra.mxu0 0.0
    %2026 = vmatprep.mubr.f32.mxu0 0.0
    %2027 = vmatmul.mubr.f32.gmra.mrb[0].mxu0 %v1862
    %v2028 = vpop.f32.mrb[0].mxu0
    %v2029 = vadd.f32 %v1849, %v2028
    %v2030 = vpop.f32.mrb[0].mxu0
    %2031 = vmatprep.mubr.f32.mxu0 0.0
    %2032 = vmatmul.mubr.f32.gmra.mrb[0].mxu0 %v1865
    %v2033 = vpop.f32.mrb[0].mxu0
    %v2034 = vadd.f32 %v1854, %v2033
    %v2035 = vpop.f32.mrb[0].mxu0
    %2036 = vmatprep.mubr.f32.mxu0 0.0
    %2037 = vmatmul.mubr.f32.gmra.mrb[0].mxu0 %v1868
    %v2038 = vpop.f32.mrb[0].mxu0
    %v2039 = vadd.f32 %v1859, %v2038
    %v2040 = vpop.f32.mrb[0].mxu0
    %2041 = vdwg.mxu0
    %v2042 = vxor.u32 %v1946, 2147483648
    %v2043 = vxor.u32 %v1948, 2147483648
    %v2044 = vxor.u32 %v2029, 2147483648
    %v2045 = vxor.u32 %v1952, 2147483648
    %v2046 = vxor.u32 %v1954, 2147483648
    %v2047 = vxor.u32 %v2034, 2147483648
    %v2048 = vxor.u32 %v1958, 2147483648
    %v2049 = vxor.u32 %v1960, 2147483648
    %v2050 = vxor.u32 %v2039, 2147483648
    %v2051 = vmul.f32 %v2042, 1.442695
    %v2052 = vpow.pop %v2051
    %v2053 = vmul.f32 %v2043, 1.442695
    %v2054 = vpow.pop %v2053
    %v2055 = vmul.f32 %v2044, 1.442695
    %v2056 = vpow.pop %v2055
    %v2057 = vmul.f32 %v2045, 1.442695
    %v2058 = vpow.pop %v2057
    %v2059 = vmul.f32 %v2046, 1.442695
    %v2060 = vpow.pop %v2059
    %v2061 = vmul.f32 %v2047, 1.442695
    %v2062 = vpow.pop %v2061
    %v2063 = vmul.f32 %v2048, 1.442695
    %v2064 = vpow.pop %v2063
    %v2065 = vmul.f32 %v2049, 1.442695
    %v2066 = vpow.pop %v2065
    %v2067 = vmul.f32 %v2050, 1.442695
    %v2068 = vpow.pop %v2067
    %v2069 = vadd.f32 %v2052, 1.0
    %v2070 = vadd.f32 %v2054, 1.0
    %v2071 = vadd.f32 %v2056, 1.0
    %v2072 = vadd.f32 %v2058, 1.0
    %v2073 = vadd.f32 %v2060, 1.0
    %v2074 = vadd.f32 %v2062, 1.0
    %v2075 = vadd.f32 %v2064, 1.0
    %v2076 = vadd.f32 %v2066, 1.0
    %v2077 = vadd.f32 %v2068, 1.0
    %v2078 = vrcp.pop %v2069
    %v2079 = vmul.f32 1.0, %v2078
    %v2080 = vrcp.pop %v2070
    %v2081 = vmul.f32 1.0, %v2080
    %v2082 = vrcp.pop %v2071
    %v2083 = vmul.f32 1.0, %v2082
    %v2084 = vrcp.pop %v2072
    %v2085 = vmul.f32 1.0, %v2084
    %v2086 = vrcp.pop %v2073
    %v2087 = vmul.f32 1.0, %v2086
    %v2088 = vrcp.pop %v2074
    %v2089 = vmul.f32 1.0, %v2088
    %v2090 = vrcp.pop %v2075
    %v2091 = vmul.f32 1.0, %v2090
    %v2092 = vrcp.pop %v2076
    %v2093 = vmul.f32 1.0, %v2092
    %v2094 = vrcp.pop %v2077
    %v2095 = vmul.f32 1.0, %v2094
    %s2096 = scalar_lea.vmem %s1, 192
    %v2097 = vld [vmem:[%s2096] sm:$0xff]
    %v2098 = vld [vmem:[%s2096 + $0x8] sm:$0xff]
    %v2099 = vld [vmem:[%s2096 + $0x10] sm:$0xf]
    %s2100 = scalar_lea.vmem %s2, 192
    %v2101 = vld [vmem:[%s2100] sm:$0xff]
    %v2102 = vld [vmem:[%s2100 + $0x8] sm:$0xff]
    %v2103 = vld [vmem:[%s2100 + $0x10] sm:$0xf]
    %2105 = vset.pattern.permute.xlu0 0
    %2106 = vperm.xlu0 %2105, %v2101
    %v2107 = vpop.permute.xlu0 %2106
    %2110 = vset.pattern.permute.xlu0 0
    %2111 = vperm.xlu0 %2110, %v2102
    %v2112 = vpop.permute.xlu0 %2111
    %2115 = vset.pattern.permute.xlu0 0
    %2116 = vperm.xlu0 %2115, %v2103
    %v2117 = vpop.permute.xlu0 %2116
    %v2120 = vsel %vm311, %v2097, 0
    %v2123 = vsel %vm311, %v2098, 0
    %v2126 = vsel %vm311, %v2099, 0
    %v2129 = vsel %vm321, %v2091, 0
    %v2132 = vsel %vm321, %v2093, 0
    %v2135 = vsel %vm321, %v2095, 0
    %2137 = vmatprep.subr.mxu0 %v2081
    %2138 = vmatpush1.msra.mxu0 %v2079
    %2139 = vmatprep.subr.mxu0 %v2087
    %2140 = vmatpush1.msra.mxu0 %v2085
    %2141 = vmatprep.subr.mxu0 %v2132
    %2142 = vmatpush1.msra.mxu0 %v2129
    %2143 = vmatprep.subr.mxu0 0.0
    %2144 = vmatpush1.msra.mxu0 0.0
    %2145 = vmatprep.subr.mxu0 0.0
    %2146 = vmatpush1.msra.mxu0 0.0
    %2147 = vmatprep.subr.mxu0 0.0
    %2148 = vmatpush1.msra.mxu0 0.0
    %2149 = vmatprep.subr.mxu0 0.0
    %2150 = vmatpush1.msra.mxu0 0.0
    %2151 = vmatprep.subr.mxu0 0.0
    %2152 = vmatpush1.msra.mxu0 0.0
    %2153 = vmatprep.subr.mxu0 0.0
    %2154 = vmatpush1.msra.mxu0 0.0
    %2155 = vmatprep.subr.mxu0 0.0
    %2156 = vmatpush1.msra.mxu0 0.0
    %2157 = vmatprep.subr.mxu0 0.0
    %2158 = vmatpush1.msra.mxu0 0.0
    %2159 = vmatprep.subr.mxu0 0.0
    %2160 = vmatpush1.msra.mxu0 0.0
    %2161 = vmatprep.subr.mxu0 0.0
    %2162 = vmatpush1.msra.mxu0 0.0
    %2163 = vmatprep.subr.mxu0 0.0
    %2164 = vmatpush1.msra.mxu0 0.0
    %2165 = vmatprep.subr.mxu0 0.0
    %2166 = vmatpush1.msra.mxu0 0.0
    %2167 = vmatprep.subr.mxu0 0.0
    %2168 = vmatpush1.msra.mxu0 0.0
    %2169 = vmatprep.subr.mxu0 0.0
    %2170 = vmatpush1.msra.mxu0 0.0
    %2171 = vmatprep.subr.mxu0 0.0
    %2172 = vmatpush1.msra.mxu0 0.0
    %2173 = vmatprep.subr.mxu0 0.0
    %2174 = vmatpush1.msra.mxu0 0.0
    %2175 = vmatprep.subr.mxu0 0.0
    %2176 = vmatpush1.msra.mxu0 0.0
    %2177 = vmatprep.subr.mxu0 0.0
    %2178 = vmatpush1.msra.mxu0 0.0
    %2179 = vmatprep.subr.mxu0 0.0
    %2180 = vmatpush1.msra.mxu0 0.0
    %2181 = vmatprep.subr.mxu0 0.0
    %2182 = vmatpush1.msra.mxu0 0.0
    %2183 = vmatprep.subr.mxu0 0.0
    %2184 = vmatpush1.msra.mxu0 0.0
    %2185 = vmatprep.subr.mxu0 0.0
    %2186 = vmatpush1.msra.mxu0 0.0
    %2187 = vmatprep.subr.mxu0 0.0
    %2188 = vmatpush1.msra.mxu0 0.0
    %2189 = vmatprep.subr.mxu0 0.0
    %2190 = vmatpush1.msra.mxu0 0.0
    %2191 = vmatprep.subr.mxu0 0.0
    %2192 = vmatpush1.msra.mxu0 0.0
    %2193 = vmatprep.subr.mxu0 0.0
    %2194 = vmatpush1.msra.mxu0 0.0
    %2195 = vmatprep.subr.mxu0 0.0
    %2196 = vmatpush1.msra.mxu0 0.0
    %2197 = vmatprep.subr.mxu0 0.0
    %2198 = vmatpush1.msra.mxu0 0.0
    %2199 = vmatprep.subr.mxu0 0.0
    %2200 = vmatpush1.msra.mxu0 0.0
    %2201 = vmatprep.mubr.f32.mxu0 0.0
    %2202 = vmatmul.mubr.f32.gmra.mrb[0].mxu0 %v2120
    %v2203 = vpop.f32.mrb[0].mxu0
    %v2204 = vadd.f32 %v2107, %v2203
    %v2205 = vpop.f32.mrb[0].mxu0
    %v2206 = vadd.f32 %v2107, %v2205
    %2207 = vmatprep.mubr.f32.mxu0 0.0
    %2208 = vmatmul.mubr.f32.gmra.mrb[0].mxu0 %v2123
    %v2209 = vpop.f32.mrb[0].mxu0
    %v2210 = vadd.f32 %v2112, %v2209
    %v2211 = vpop.f32.mrb[0].mxu0
    %v2212 = vadd.f32 %v2112, %v2211
    %2213 = vmatprep.mubr.f32.mxu0 0.0
    %2214 = vmatmul.mubr.f32.gmra.mrb[0].mxu0 %v2126
    %v2215 = vpop.f32.mrb[0].mxu0
    %v2216 = vadd.f32 %v2117, %v2215
    %v2217 = vpop.f32.mrb[0].mxu0
    %v2218 = vadd.f32 %v2117, %v2217
    %2219 = vdwg.mxu0
    %2220 = vmatprep.subr.mxu0 0.0
    %2221 = vmatpush1.msra.mxu0 %v2083
    %2222 = vmatprep.subr.mxu0 0.0
    %2223 = vmatpush1.msra.mxu0 %v2089
    %2224 = vmatprep.subr.mxu0 0.0
    %2225 = vmatpush1.msra.mxu0 %v2135
    %2226 = vmatprep.subr.mxu0 0.0
    %2227 = vmatpush1.msra.mxu0 0.0
    %2228 = vmatprep.subr.mxu0 0.0
    %2229 = vmatpush1.msra.mxu0 0.0
    %2230 = vmatprep.subr.mxu0 0.0
    %2231 = vmatpush1.msra.mxu0 0.0
    %2232 = vmatprep.subr.mxu0 0.0
    %2233 = vmatpush1.msra.mxu0 0.0
    %2234 = vmatprep.subr.mxu0 0.0
    %2235 = vmatpush1.msra.mxu0 0.0
    %2236 = vmatprep.subr.mxu0 0.0
    %2237 = vmatpush1.msra.mxu0 0.0
    %2238 = vmatprep.subr.mxu0 0.0
    %2239 = vmatpush1.msra.mxu0 0.0
    %2240 = vmatprep.subr.mxu0 0.0
    %2241 = vmatpush1.msra.mxu0 0.0
    %2242 = vmatprep.subr.mxu0 0.0
    %2243 = vmatpush1.msra.mxu0 0.0
    %2244 = vmatprep.subr.mxu0 0.0
    %2245 = vmatpush1.msra.mxu0 0.0
    %2246 = vmatprep.subr.mxu0 0.0
    %2247 = vmatpush1.msra.mxu0 0.0
    %2248 = vmatprep.subr.mxu0 0.0
    %2249 = vmatpush1.msra.mxu0 0.0
    %2250 = vmatprep.subr.mxu0 0.0
    %2251 = vmatpush1.msra.mxu0 0.0
    %2252 = vmatprep.subr.mxu0 0.0
    %2253 = vmatpush1.msra.mxu0 0.0
    %2254 = vmatprep.subr.mxu0 0.0
    %2255 = vmatpush1.msra.mxu0 0.0
    %2256 = vmatprep.subr.mxu0 0.0
    %2257 = vmatpush1.msra.mxu0 0.0
    %2258 = vmatprep.subr.mxu0 0.0
    %2259 = vmatpush1.msra.mxu0 0.0
    %2260 = vmatprep.subr.mxu0 0.0
    %2261 = vmatpush1.msra.mxu0 0.0
    %2262 = vmatprep.subr.mxu0 0.0
    %2263 = vmatpush1.msra.mxu0 0.0
    %2264 = vmatprep.subr.mxu0 0.0
    %2265 = vmatpush1.msra.mxu0 0.0
    %2266 = vmatprep.subr.mxu0 0.0
    %2267 = vmatpush1.msra.mxu0 0.0
    %2268 = vmatprep.subr.mxu0 0.0
    %2269 = vmatpush1.msra.mxu0 0.0
    %2270 = vmatprep.subr.mxu0 0.0
    %2271 = vmatpush1.msra.mxu0 0.0
    %2272 = vmatprep.subr.mxu0 0.0
    %2273 = vmatpush1.msra.mxu0 0.0
    %2274 = vmatprep.subr.mxu0 0.0
    %2275 = vmatpush1.msra.mxu0 0.0
    %2276 = vmatprep.subr.mxu0 0.0
    %2277 = vmatpush1.msra.mxu0 0.0
    %2278 = vmatprep.subr.mxu0 0.0
    %2279 = vmatpush1.msra.mxu0 0.0
    %2280 = vmatprep.subr.mxu0 0.0
    %2281 = vmatpush1.msra.mxu0 0.0
    %2282 = vmatprep.subr.mxu0 0.0
    %2283 = vmatpush1.msra.mxu0 0.0
    %2284 = vmatprep.mubr.f32.mxu0 0.0
    %2285 = vmatmul.mubr.f32.gmra.mrb[0].mxu0 %v2120
    %v2286 = vpop.f32.mrb[0].mxu0
    %v2287 = vadd.f32 %v2107, %v2286
    %v2288 = vpop.f32.mrb[0].mxu0
    %2289 = vmatprep.mubr.f32.mxu0 0.0
    %2290 = vmatmul.mubr.f32.gmra.mrb[0].mxu0 %v2123
    %v2291 = vpop.f32.mrb[0].mxu0
    %v2292 = vadd.f32 %v2112, %v2291
    %v2293 = vpop.f32.mrb[0].mxu0
    %2294 = vmatprep.mubr.f32.mxu0 0.0
    %2295 = vmatmul.mubr.f32.gmra.mrb[0].mxu0 %v2126
    %v2296 = vpop.f32.mrb[0].mxu0
    %v2297 = vadd.f32 %v2117, %v2296
    %v2298 = vpop.f32.mrb[0].mxu0
    %2299 = vdwg.mxu0
    %v2300 = vxor.u32 %v2204, 2147483648
    %v2301 = vxor.u32 %v2206, 2147483648
    %v2302 = vxor.u32 %v2287, 2147483648
    %v2303 = vxor.u32 %v2210, 2147483648
    %v2304 = vxor.u32 %v2212, 2147483648
    %v2305 = vxor.u32 %v2292, 2147483648
    %v2306 = vxor.u32 %v2216, 2147483648
    %v2307 = vxor.u32 %v2218, 2147483648
    %v2308 = vxor.u32 %v2297, 2147483648
    %v2309 = vmul.f32 %v2300, 1.442695
    %v2310 = vpow.pop %v2309
    %v2311 = vmul.f32 %v2301, 1.442695
    %v2312 = vpow.pop %v2311
    %v2313 = vmul.f32 %v2302, 1.442695
    %v2314 = vpow.pop %v2313
    %v2315 = vmul.f32 %v2303, 1.442695
    %v2316 = vpow.pop %v2315
    %v2317 = vmul.f32 %v2304, 1.442695
    %v2318 = vpow.pop %v2317
    %v2319 = vmul.f32 %v2305, 1.442695
    %v2320 = vpow.pop %v2319
    %v2321 = vmul.f32 %v2306, 1.442695
    %v2322 = vpow.pop %v2321
    %v2323 = vmul.f32 %v2307, 1.442695
    %v2324 = vpow.pop %v2323
    %v2325 = vmul.f32 %v2308, 1.442695
    %v2326 = vpow.pop %v2325
    %v2327 = vadd.f32 %v2310, 1.0
    %v2328 = vadd.f32 %v2312, 1.0
    %v2329 = vadd.f32 %v2314, 1.0
    %v2330 = vadd.f32 %v2316, 1.0
    %v2331 = vadd.f32 %v2318, 1.0
    %v2332 = vadd.f32 %v2320, 1.0
    %v2333 = vadd.f32 %v2322, 1.0
    %v2334 = vadd.f32 %v2324, 1.0
    %v2335 = vadd.f32 %v2326, 1.0
    %v2336 = vrcp.pop %v2327
    %v2337 = vmul.f32 1.0, %v2336
    %v2338 = vrcp.pop %v2328
    %v2339 = vmul.f32 1.0, %v2338
    %v2340 = vrcp.pop %v2329
    %v2341 = vmul.f32 1.0, %v2340
    %v2342 = vrcp.pop %v2330
    %v2343 = vmul.f32 1.0, %v2342
    %v2344 = vrcp.pop %v2331
    %v2345 = vmul.f32 1.0, %v2344
    %v2346 = vrcp.pop %v2332
    %v2347 = vmul.f32 1.0, %v2346
    %v2348 = vrcp.pop %v2333
    %v2349 = vmul.f32 1.0, %v2348
    %v2350 = vrcp.pop %v2334
    %v2351 = vmul.f32 1.0, %v2350
    %v2352 = vrcp.pop %v2335
    %v2353 = vmul.f32 1.0, %v2352
    %s2354 = scalar_lea.vmem %s1, 216
    %v2355 = vld [vmem:[%s2354] sm:$0xff]
    %v2356 = vld [vmem:[%s2354 + $0x8] sm:$0xff]
    %v2357 = vld [vmem:[%s2354 + $0x10] sm:$0xf]
    %s2358 = scalar_lea.vmem %s2, 216
    %v2359 = vld [vmem:[%s2358] sm:$0xff]
    %v2360 = vld [vmem:[%s2358 + $0x8] sm:$0xff]
    %v2361 = vld [vmem:[%s2358 + $0x10] sm:$0xf]
    %2363 = vset.pattern.permute.xlu0 0
    %2364 = vperm.xlu0 %2363, %v2359
    %v2365 = vpop.permute.xlu0 %2364
    %2368 = vset.pattern.permute.xlu0 0
    %2369 = vperm.xlu0 %2368, %v2360
    %v2370 = vpop.permute.xlu0 %2369
    %2372 = vset.pattern.permute.xlu0 0
    %2373 = vperm.xlu0 %2372, %v2361
    %v2374 = vpop.permute.xlu0 %2373
    %v2376 = vsel %vm311, %v2355, 0
    %v2379 = vsel %vm311, %v2356, 0
    %v2382 = vsel %vm311, %v2357, 0
    %v2385 = vsel %vm321, %v2349, 0
    %v2388 = vsel %vm321, %v2351, 0
    %v2391 = vsel %vm321, %v2353, 0
    %2393 = vmatprep.subr.mxu0 %v2339
    %2394 = vmatpush1.msra.mxu0 %v2337
    %2395 = vmatprep.subr.mxu0 %v2345
    %2396 = vmatpush1.msra.mxu0 %v2343
    %2397 = vmatprep.subr.mxu0 %v2388
    %2398 = vmatpush1.msra.mxu0 %v2385
    %2399 = vmatprep.subr.mxu0 0.0
    %2400 = vmatpush1.msra.mxu0 0.0
    %2401 = vmatprep.subr.mxu0 0.0
    %2402 = vmatpush1.msra.mxu0 0.0
    %2403 = vmatprep.subr.mxu0 0.0
    %2404 = vmatpush1.msra.mxu0 0.0
    %2405 = vmatprep.subr.mxu0 0.0
    %2406 = vmatpush1.msra.mxu0 0.0
    %2407 = vmatprep.subr.mxu0 0.0
    %2408 = vmatpush1.msra.mxu0 0.0
    %2409 = vmatprep.subr.mxu0 0.0
    %2410 = vmatpush1.msra.mxu0 0.0
    %2411 = vmatprep.subr.mxu0 0.0
    %2412 = vmatpush1.msra.mxu0 0.0
    %2413 = vmatprep.subr.mxu0 0.0
    %2414 = vmatpush1.msra.mxu0 0.0
    %2415 = vmatprep.subr.mxu0 0.0
    %2416 = vmatpush1.msra.mxu0 0.0
    %2417 = vmatprep.subr.mxu0 0.0
    %2418 = vmatpush1.msra.mxu0 0.0
    %2419 = vmatprep.subr.mxu0 0.0
    %2420 = vmatpush1.msra.mxu0 0.0
    %2421 = vmatprep.subr.mxu0 0.0
    %2422 = vmatpush1.msra.mxu0 0.0
    %2423 = vmatprep.subr.mxu0 0.0
    %2424 = vmatpush1.msra.mxu0 0.0
    %2425 = vmatprep.subr.mxu0 0.0
    %2426 = vmatpush1.msra.mxu0 0.0
    %2427 = vmatprep.subr.mxu0 0.0
    %2428 = vmatpush1.msra.mxu0 0.0
    %2429 = vmatprep.subr.mxu0 0.0
    %2430 = vmatpush1.msra.mxu0 0.0
    %2431 = vmatprep.subr.mxu0 0.0
    %2432 = vmatpush1.msra.mxu0 0.0
    %2433 = vmatprep.subr.mxu0 0.0
    %2434 = vmatpush1.msra.mxu0 0.0
    %2435 = vmatprep.subr.mxu0 0.0
    %2436 = vmatpush1.msra.mxu0 0.0
    %2437 = vmatprep.subr.mxu0 0.0
    %2438 = vmatpush1.msra.mxu0 0.0
    %2439 = vmatprep.subr.mxu0 0.0
    %2440 = vmatpush1.msra.mxu0 0.0
    %2441 = vmatprep.subr.mxu0 0.0
    %2442 = vmatpush1.msra.mxu0 0.0
    %2443 = vmatprep.subr.mxu0 0.0
    %2444 = vmatpush1.msra.mxu0 0.0
    %2445 = vmatprep.subr.mxu0 0.0
    %2446 = vmatpush1.msra.mxu0 0.0
    %2447 = vmatprep.subr.mxu0 0.0
    %2448 = vmatpush1.msra.mxu0 0.0
    %2449 = vmatprep.subr.mxu0 0.0
    %2450 = vmatpush1.msra.mxu0 0.0
    %2451 = vmatprep.subr.mxu0 0.0
    %2452 = vmatpush1.msra.mxu0 0.0
    %2453 = vmatprep.subr.mxu0 0.0
    %2454 = vmatpush1.msra.mxu0 0.0
    %2455 = vmatprep.subr.mxu0 0.0
    %2456 = vmatpush1.msra.mxu0 0.0
    %2457 = vmatprep.mubr.f32.mxu0 0.0
    %2458 = vmatmul.mubr.f32.gmra.mrb[0].mxu0 %v2376
    %v2459 = vpop.f32.mrb[0].mxu0
    %v2460 = vadd.f32 %v2365, %v2459
    %v2461 = vpop.f32.mrb[0].mxu0
    %v2462 = vadd.f32 %v2365, %v2461
    %2463 = vmatprep.mubr.f32.mxu0 0.0
    %2464 = vmatmul.mubr.f32.gmra.mrb[0].mxu0 %v2379
    %v2465 = vpop.f32.mrb[0].mxu0
    %v2466 = vpop.f32.mrb[0].mxu0
    %2467 = vmatprep.mubr.f32.mxu0 0.0
    %2468 = vmatmul.mubr.f32.gmra.mrb[0].mxu0 %v2382
    %v2469 = vpop.f32.mrb[0].mxu0
    %v2470 = vpop.f32.mrb[0].mxu0
    %2471 = vdwg.mxu0
    %2472 = vmatprep.subr.mxu0 0.0
    %2473 = vmatpush1.msra.mxu0 %v2341
    %2474 = vmatprep.subr.mxu0 0.0
    %2475 = vmatpush1.msra.mxu0 %v2347
    %2476 = vmatprep.subr.mxu0 0.0
    %2477 = vmatpush1.msra.mxu0 %v2391
    %2478 = vmatprep.subr.mxu0 0.0
    %2479 = vmatpush1.msra.mxu0 0.0
    %2480 = vmatprep.subr.mxu0 0.0
    %2481 = vmatpush1.msra.mxu0 0.0
    %2482 = vmatprep.subr.mxu0 0.0
    %2483 = vmatpush1.msra.mxu0 0.0
    %2484 = vmatprep.subr.mxu0 0.0
    %2485 = vmatpush1.msra.mxu0 0.0
    %2486 = vmatprep.subr.mxu0 0.0
    %2487 = vmatpush1.msra.mxu0 0.0
    %2488 = vmatprep.subr.mxu0 0.0
    %2489 = vmatpush1.msra.mxu0 0.0
    %2490 = vmatprep.subr.mxu0 0.0
    %2491 = vmatpush1.msra.mxu0 0.0
    %2492 = vmatprep.subr.mxu0 0.0
    %2493 = vmatpush1.msra.mxu0 0.0
    %2494 = vmatprep.subr.mxu0 0.0
    %2495 = vmatpush1.msra.mxu0 0.0
    %2496 = vmatprep.subr.mxu0 0.0
    %2497 = vmatpush1.msra.mxu0 0.0
    %2498 = vmatprep.subr.mxu0 0.0
    %2499 = vmatpush1.msra.mxu0 0.0
    %2500 = vmatprep.subr.mxu0 0.0
    %2501 = vmatpush1.msra.mxu0 0.0
    %2502 = vmatprep.subr.mxu0 0.0
    %2503 = vmatpush1.msra.mxu0 0.0
    %2504 = vmatprep.subr.mxu0 0.0
    %2505 = vmatpush1.msra.mxu0 0.0
    %2506 = vmatprep.subr.mxu0 0.0
    %2507 = vmatpush1.msra.mxu0 0.0
    %2508 = vmatprep.subr.mxu0 0.0
    %2509 = vmatpush1.msra.mxu0 0.0
    %2510 = vmatprep.subr.mxu0 0.0
    %2511 = vmatpush1.msra.mxu0 0.0
    %2512 = vmatprep.subr.mxu0 0.0
    %2513 = vmatpush1.msra.mxu0 0.0
    %2514 = vmatprep.subr.mxu0 0.0
    %2515 = vmatpush1.msra.mxu0 0.0
    %2516 = vmatprep.subr.mxu0 0.0
    %2517 = vmatpush1.msra.mxu0 0.0
    %2518 = vmatprep.subr.mxu0 0.0
    %2519 = vmatpush1.msra.mxu0 0.0
    %2520 = vmatprep.subr.mxu0 0.0
    %2521 = vmatpush1.msra.mxu0 0.0
    %2522 = vmatprep.subr.mxu0 0.0
    %2523 = vmatpush1.msra.mxu0 0.0
    %2524 = vmatprep.subr.mxu0 0.0
    %2525 = vmatpush1.msra.mxu0 0.0
    %2526 = vmatprep.subr.mxu0 0.0
    %2527 = vmatpush1.msra.mxu0 0.0
    %2528 = vmatprep.subr.mxu0 0.0
    %2529 = vmatpush1.msra.mxu0 0.0
    %2530 = vmatprep.subr.mxu0 0.0
    %2531 = vmatpush1.msra.mxu0 0.0
    %2532 = vmatprep.subr.mxu0 0.0
    %2533 = vmatpush1.msra.mxu0 0.0
    %2534 = vmatprep.subr.mxu0 0.0
    %2535 = vmatpush1.msra.mxu0 0.0
    %2536 = vmatprep.mubr.f32.mxu0 0.0
    %2537 = vmatmul.mubr.f32.gmra.mrb[0].mxu0 %v2376
    %v2538 = vpop.f32.mrb[0].mxu0
    %v2539 = vadd.f32 %v2365, %v2538
    %v2540 = vpop.f32.mrb[0].mxu0
    %2541 = vmatprep.mubr.f32.mxu0 0.0
    %2542 = vmatmul.mubr.f32.gmra.mrb[0].mxu0 %v2379
    %v2543 = vpop.f32.mrb[0].mxu0
    %v2544 = vpop.f32.mrb[0].mxu0
    %2545 = vmatprep.mubr.f32.mxu0 0.0
    %2546 = vmatmul.mubr.f32.gmra.mrb[0].mxu0 %v2382
    %v2547 = vpop.f32.mrb[0].mxu0
    %v2548 = vpop.f32.mrb[0].mxu0
    %2549 = vdwg.mxu0
    %v2550 = vlaneseq
    %v2551 = vshrl.u32 %v2550, 7
    %vm2552 = vcmp.lt.s32.totalorder %v2551, 3
    %v2553 = vmul.f32 %v2460, 1.442695
    %v2554 = vpow.pop %v2553
    %v2555 = vmul.f32 %v2462, 1.442695
    %v2556 = vpow.pop %v2555
    %v2557 = vmul.f32 %v2539, 1.442695
    %v2558 = vpow.pop %v2557
    %v2559 = vmul.f32 %v2460, 0.1
    %v2560 = vmul.f32 %v2462, 0.1
    %v2561 = vmul.f32 %v2539, 0.1
    %v2562 = vsel %vm2552, %v2554, %v2559
    %v2563 = vsel %vm2552, %v2556, %v2560
    %v2564 = vsel %vm2552, %v2558, %v2561
    %2565 = vst [vmem:[#allocation2] sm:$0x3f] %v2562
    %2566 = vst [vmem:[#allocation2 + $0x8] sm:$0x3f] %v2563
    %2567 = vst [vmem:[#allocation2 + $0x10] sm:$0x3f] %v2564
    // Predicated region
    $region14: #{tpu_custom_call.1} parent=1 // pred_check
      _
    $region15: #{tpu_custom_call.1} parent=1 // pred_check_branch
      %2569 = sbr.rel (0) target = $region17
    $region16: #{tpu_custom_call.1} parent=1 // pred_region
      %s2571 = ssub.s32 384, 384
      %2572 = vsyncadd [#allocation3], %s2571
      %s2574 = sshll.u32 [#allocation2], 4
      %s2575 = int_to_ptr.vmem [resolvable:$true] %s2574
      %2577 = dma.vmem_to_hbm [thread:$0]  %s2575, 384, %s3, [#allocation3]
    $region17: #{tpu_custom_call.1} parent=1 // pred_fallthru
      _
    // Predicated region
    $region18: #{tpu_custom_call.1} parent=1 // pred_check
      _
    $region19: #{tpu_custom_call.1} parent=1 // pred_check_branch
      %2579 = sbr.rel (0) target = $region21
    $region20: #{tpu_custom_call.1} parent=1 // pred_region
      %2580 = dma.done [#allocation3], 384
    $region21: #{tpu_custom_call.1} parent=1 // pred_fallthru
      _
    %2581 = vsyncpa [#allocation3], 1

</llo_original>
